<compile_context>
chip_gen: v7x
topology: tpu7x:2x2x1
jax: 0.10.0
libtpu: 0.0.40
codegen_flags: <defaults>
</compile_context>

<pallas_src>
import functools

import jax
import jax.numpy as jnp
from jax.experimental import pallas as pl
from jax.experimental.pallas import tpu as pltpu


# ----------------------------------------------------------------------------
# Fused kernel: proc1 + proc2 (branch-fused convs) + SE + combine, per batch tile
# ----------------------------------------------------------------------------
def rcabp_kernel(x_ref, m_ref, wf0_ref, wf_ref, cbp_ref, seA_ref, seB_ref,
                 o_ref, patch_ref,
                 *, img_w, img_hw, cp, cout, c2, c4, n_fused):
    # x_ref    : (Cp, N)            input, channels padded to Cp, N = Bt*H*W
    # m_ref    : (8, 1, N)          boundary masks for the 8 non-center taps
    # wf0_ref  : (C2, 9*Cp)         layer-0 weights of both branches, stacked
    # wf_ref   : (n_fused, C2, 9*C2) block-diagonal fused weights, layers >=1
    # cbp_ref  : (n_fused+1, 3, C2, 1)  per layer: [BN scale, BN bias, alpha]
    # seA_ref  : (C4, Cout+1)       [w1^T | b1]
    # seB_ref  : (Cout, C4+2)       [w2^T | b2 | bottleneck alpha]
    # o_ref    : (Cout, N)
    # patch_ref: VMEM scratch (9*C2, N) for im2col patches
    n = x_ref.shape[1]
    bt = n // img_hw

    # Hoisted mask broadcasts (full fused width); layer 0 slices the top Cp rows.
    maskb = [jnp.broadcast_to(m_ref[j], (c2, n)) for j in range(8)]

    def im2col(state, rows, masks):
        # state (rows, N): write the 9 shifted+masked taps into patch_ref rows
        # [t*rows:(t+1)*rows].  Lane rolls go to the XLU, masks to the VPU.
        for t in range(9):
            dy, dx = t // 3 - 1, t % 3 - 1
            d = dy * img_w + dx
            if d == 0:                                  # center tap: no roll/mask
                tap = state
            else:
                r = pltpu.roll(state, shift=(-d) % n, axis=1)
                tap = r * masks[t if t < 4 else t - 1]
            patch_ref[t * rows:(t + 1) * rows, :] = tap

    def bn_prelu(y, layer):
        p = cbp_ref[layer]                              # (3, C2, 1)
        y = y * p[0] + p[1]                             # folded BN (eval mode)
        return jnp.where(y > 0, y, p[2] * y)            # per-row PReLU

    # ---- layer 0: ONE shared im2col of x, both branches in one matmul ------
    x = x_ref[...]                                      # (Cp, N)
    im2col(x, cp, [m[:cp] for m in maskb])
    y = jnp.dot(wf0_ref[...], patch_ref[0:9 * cp, :],
                preferred_element_type=jnp.float32)     # (C2, N)
    y = bn_prelu(y, 0)

    # ---- layers 1..: branches fused block-diagonally -> one matmul each ----
    for l in range(n_fused):
        im2col(y, c2, maskb)
        y = jnp.dot(wf_ref[l], patch_ref[...],
                    preferred_element_type=jnp.float32)  # (C2, N)
        y = bn_prelu(y, l + 1)

    t1 = y[:cout]                                       # proc1 output (Cout, N)
    t2 = y[cout:]                                       # proc2 output (Cout, N)

    # ---- squeeze & excite: per-image pooling + tiny FCs, all on the VPU ----
    pooled = jnp.concatenate(
        [jnp.sum(t2[:, b * img_hw:(b + 1) * img_hw], axis=1, keepdims=True)
         for b in range(bt)], axis=1) * (1.0 / img_hw)  # (Cout, Bt)

    seA = seA_ref[...]                                  # (C4, Cout+1)
    seB = seB_ref[...]                                  # (Cout, C4+2)
    z = jnp.broadcast_to(seA[:, cout:cout + 1], (c4, bt))          # + b1
    for c in range(cout):
        z = z + seA[:, c:c + 1] * pooled[c:c + 1, :]
    ab = seB[0:1, c4 + 1:c4 + 2]                        # bottleneck PReLU alpha
    z = jnp.where(z > 0, z, ab * z)
    s = jnp.broadcast_to(seB[:, c4:c4 + 1], (cout, bt))             # + b2
    for j in range(c4):
        s = s + seB[:, j:j + 1] * z[j:j + 1, :]
    s = jax.nn.sigmoid(s)                               # (Cout, Bt) per-image gate

    # ---- gate * proc2 + proc1, lane-dense per-image stores ------------------
    for b in range(bt):
        sl = slice(b * img_hw, (b + 1) * img_hw)
        o_ref[:, sl] = (s[:, b:b + 1] * t2[:, sl] + t1[:, sl]).astype(o_ref.dtype)


# ----------------------------------------------------------------------------
# Wrapper: parameter folding / packing + single pallas_call
# ----------------------------------------------------------------------------
def rcabp_forward(x_nchw, proc1_params, proc2_params, conv_alphas,
                  w1, b1, w2, b2, bottleneck_alpha, batch_tile=None):
    B, Cin, H, W = x_nchw.shape
    Cout = proc1_params[0][0].shape[0]
    C4 = w1.shape[1]
    HW = H * W
    n1, n2 = len(proc1_params), len(proc2_params)
    assert n1 == n2 and n1 >= 2
    n_fused = n1 - 1
    C2 = 2 * Cout
    Cp = max(Cout, ((Cin + 7) // 8) * 8)
    assert Cout % 8 == 0 and HW % 128 == 0 and Cin <= Cp

    # Batch tile: fold images into the lane axis.  The cap keeps the per-step
    # VMEM footprint (patches scratch + state + hoisted masks ~0.45 MiB/image)
    # well under the 16/32 MiB scoped-VMEM defaults of v5e/v6e/v7x, and
    # cdiv(B, 2) keeps >= 2 grid steps so both v7x TensorCores get work.
    if batch_tile is None:
        batch_tile = max(1, min(16, pl.cdiv(B, 2)))
    Bt = int(batch_tile)
    Bpad = pl.cdiv(B, Bt) * Bt
    N = Bt * HW
    grid = (Bpad // Bt,)

    # ---- input: (B, Cin, H, W) -> (Cp, Bpad*HW), channels on sublanes ------
    x = x_nchw.astype(jnp.float32)
    x = jnp.pad(x, ((0, Bpad - B), (0, Cp - Cin), (0, 0), (0, 0)))
    x = jnp.transpose(x.reshape(Bpad, Cp, HW), (1, 0, 2)).reshape(Cp, Bpad * HW)

    # ---- boundary masks for the 8 non-center taps, tiled per image ---------
    yi = jnp.arange(H)[:, None]
    xi = jnp.arange(W)[None, :]
    mrows = []
    for t in range(9):
        if t == 4:
            continue
        dy, dx = t // 3 - 1, t % 3 - 1
        v = ((yi + dy >= 0) & (yi + dy < H) & (xi + dx >= 0) & (xi + dx < W))
        mrows.append(jnp.tile(v.reshape(HW), Bt))
    masks = jnp.stack(mrows).reshape(8, 1, N).astype(jnp.float32)

    # ---- conv weights: layer 0 stacked, layers >=1 fused block-diagonal ----
    def fold(w, cpad, front_pad=0):
        co, ci = w.shape[:2]
        wp = jnp.pad(w, ((0, 0), (front_pad, cpad - ci - front_pad),
                         (0, 0), (0, 0)))
        return jnp.transpose(wp, (0, 2, 3, 1)).reshape(co, 9 * cpad)

    l1, l2 = list(proc1_params), list(proc2_params)
    wf0 = jnp.concatenate([fold(l1[0][0], Cp), fold(l2[0][0], Cp)],
                          axis=0).astype(jnp.float32)               # (C2, 9*Cp)
    wf = jnp.stack(
        [jnp.concatenate([fold(l1[l][0], C2),
                          fold(l2[l][0], C2, front_pad=Cout)], axis=0)
         for l in range(1, n1)]).astype(jnp.float32)                # (n_fused, C2, 9*C2)

    # ---- folded BN scale / bias / PReLU alpha per fused layer --------------
    cbp = jnp.stack([
        jnp.stack([jnp.concatenate([l1[l][1], l2[l][1]]),
                   jnp.concatenate([l1[l][2], l2[l][2]]),
                   jnp.concatenate([jnp.full((Cout,), conv_alphas[l], jnp.float32),
                                    jnp.full((Cout,), conv_alphas[n1 + l], jnp.float32)])])
        for l in range(n1)]).reshape(n1, 3, C2, 1).astype(jnp.float32)

    # ---- packed SE params ----------------------------------------------------
    seA = jnp.concatenate([jnp.transpose(w1), b1.reshape(C4, 1)],
                          axis=1).astype(jnp.float32)               # (C4, Cout+1)
    seB = jnp.concatenate([jnp.transpose(w2), b2.reshape(Cout, 1),
                           jnp.full((Cout, 1), bottleneck_alpha)],
                          axis=1).astype(jnp.float32)               # (Cout, C4+2)

    kernel = functools.partial(
        rcabp_kernel, img_w=W, img_hw=HW, cp=Cp, cout=Cout, c2=C2, c4=C4,
        n_fused=n_fused)

    flops = 2 * Bpad * HW * (C2 * 9 * Cp + n_fused * C2 * 9 * C2)
    bytes_accessed = 4 * (Cp * Bpad * HW + Cout * Bpad * HW + masks.size
                          + wf0.size + wf.size + cbp.size + seA.size + seB.size)

    out = pl.pallas_call(
        kernel,
        out_shape=jax.ShapeDtypeStruct((Cout, Bpad * HW), jnp.float32),
        grid_spec=pltpu.PrefetchScalarGridSpec(
            num_scalar_prefetch=0,
            grid=grid,
            in_specs=[
                pl.BlockSpec((Cp, N), lambda g: (0, g)),
                pl.BlockSpec((8, 1, N), lambda g: (0, 0, 0)),
                pl.BlockSpec((C2, 9 * Cp), lambda g: (0, 0)),
                pl.BlockSpec((n_fused, C2, 9 * C2), lambda g: (0, 0, 0)),
                pl.BlockSpec((n1, 3, C2, 1), lambda g: (0, 0, 0, 0)),
                pl.BlockSpec((C4, Cout + 1), lambda g: (0, 0)),
                pl.BlockSpec((Cout, C4 + 2), lambda g: (0, 0)),
            ],
            out_specs=pl.BlockSpec((Cout, N), lambda g: (0, g)),
            scratch_shapes=[pltpu.VMEM((9 * C2, N), jnp.float32)],
        ),
        compiler_params=pltpu.CompilerParams(
            dimension_semantics=("parallel",)),
        cost_estimate=pl.CostEstimate(
            flops=int(flops),
            transcendentals=int(Bpad * Cout),
            bytes_accessed=int(bytes_accessed)),
    )(x, masks, wf0, wf, cbp, seA, seB)

    # (Cout, Bpad*HW) -> (B, Cout, H, W)
    return out.reshape(Cout, Bpad, H, W).transpose(1, 0, 2, 3)[:B]


# ----------------------------------------------------------------------------
# Plain-JAX reference (eval-mode semantics of the PyTorch module)
# ----------------------------------------------------------------------------
def rcabp_ref(x, proc1_params, proc2_params, conv_alphas,
              w1, b1, w2, b2, bottleneck_alpha):
    n1 = len(proc1_params)

    def layer(x, w, s, bb, a):
        y = jax.lax.conv_general_dilated(
            x, w, (1, 1), ((1, 1), (1, 1)),
            dimension_numbers=("NCHW", "OIHW", "NCHW"))
        y = y * s.reshape(1, -1, 1, 1) + bb.reshape(1, -1, 1, 1)
        return jnp.where(y > 0, y, a * y)

    t1 = x
    for (w, s, bb), a in zip(proc1_params, conv_alphas[:n1]):
        t1 = layer(t1, w, s, bb, a)
    t2 = x
    for (w, s, bb), a in zip(proc2_params, conv_alphas[n1:]):
        t2 = layer(t2, w, s, bb, a)
    pooled = jnp.mean(t2, axis=(2, 3))                    # (B, C)
    z = pooled @ w1 + b1
    z = jnp.where(z > 0, z, bottleneck_alpha * z)
    sg = jax.nn.sigmoid(z @ w2 + b2)                      # (B, C)
    return sg[:, :, None, None] * t2 + t1


# ----------------------------------------------------------------------------
# Deterministic synthetic parameters (eval-mode BN fold)
# ----------------------------------------------------------------------------
def init_conv_bn(key, cin, cout):
    k = jax.random.split(key, 6)
    w = jax.random.normal(k[0], (cout, cin, 3, 3), jnp.float32) / jnp.sqrt(9.0 * cin)
    conv_b = 0.05 * jax.random.normal(k[1], (cout,), jnp.float32)
    gamma = 1.0 + 0.1 * jax.random.normal(k[2], (cout,), jnp.float32)
    beta = 0.05 * jax.random.normal(k[3], (cout,), jnp.float32)
    run_mean = 0.05 * jax.random.normal(k[4], (cout,), jnp.float32)
    run_var = 1.0 + 0.1 * jnp.abs(jax.random.normal(k[5], (cout,), jnp.float32))
    eps = 1e-5
    scale = gamma / jnp.sqrt(run_var + eps)
    eff_bias = (conv_b - run_mean) * scale + beta
    return w, scale, eff_bias


if __name__ == "__main__":
    inf, onf = 4, 8
    B, H, W = 2, 16, 16

    key = jax.random.PRNGKey(0)
    keys = jax.random.split(key, 12)

    x_nchw = jax.random.normal(keys[0], (B, inf, H, W), jnp.float32)

    proc1 = [init_conv_bn(keys[1], inf, onf),
             init_conv_bn(keys[2], onf, onf),
             init_conv_bn(keys[3], onf, onf)]
    proc2 = [init_conv_bn(keys[4], inf, onf),
             init_conv_bn(keys[5], onf, onf),
             init_conv_bn(keys[6], onf, onf)]

    # Per-layer PReLU alphas (nn.PReLU() is an independent parameter per layer).
    conv_alphas = (0.25, 0.20, 0.30, 0.25, 0.15, 0.35)
    bottleneck_alpha = 0.25

    w1 = 0.3 * jax.random.normal(keys[7], (onf, onf // 4), jnp.float32)
    b1 = 0.05 * jax.random.normal(keys[8], (onf // 4,), jnp.float32)
    w2 = 0.3 * jax.random.normal(keys[9], (onf // 4, onf), jnp.float32)
    b2 = 0.05 * jax.random.normal(keys[10], (onf,), jnp.float32)

    out = rcabp_forward(x_nchw, proc1, proc2, conv_alphas,
                        w1, b1, w2, b2, bottleneck_alpha)
    out = jax.block_until_ready(out)
    ref = rcabp_ref(x_nchw, proc1, proc2, conv_alphas,
                    w1, b1, w2, b2, bottleneck_alpha)
    err = float(jnp.max(jnp.abs(out - ref)))
    assert out.shape == (B, onf, H, W)
    assert jnp.allclose(out, ref, atol=1e-4, rtol=1e-4), err

    # Second config: odd batch -> exercises batch-in-lanes (Bt > 1), batch
    # padding and the per-image segmented SE reduction path.
    B2 = 5
    x2 = jax.random.normal(keys[11], (B2, inf, H, W), jnp.float32)
    out2 = jax.block_until_ready(
        rcabp_forward(x2, proc1, proc2, conv_alphas,
                      w1, b1, w2, b2, bottleneck_alpha))
    ref2 = rcabp_ref(x2, proc1, proc2, conv_alphas,
                     w1, b1, w2, b2, bottleneck_alpha)
    err2 = float(jnp.max(jnp.abs(out2 - ref2)))
    assert out2.shape == (B2, onf, H, W)
    assert jnp.allclose(out2, ref2, atol=1e-4, rtol=1e-4), err2

    print("KERNEL_OK")
</pallas_src>

<mosaic_0001>
module attributes {stable_mosaic.version = 11 : i64} {
  func.func @rcabp_kernel(%arg0: i32, %arg1: memref<8x256xf32, #tpu.memory_space<vmem>>, %arg2: memref<8x1x256xf32, #tpu.memory_space<vmem>>, %arg3: memref<16x72xf32, #tpu.memory_space<vmem>>, %arg4: memref<2x16x144xf32, #tpu.memory_space<vmem>>, %arg5: memref<3x3x16x1xf32, #tpu.memory_space<vmem>>, %arg6: memref<2x9xf32, #tpu.memory_space<vmem>>, %arg7: memref<8x4xf32, #tpu.memory_space<vmem>>, %arg8: memref<8x256xf32, #tpu.memory_space<vmem>>, %arg9: memref<144x256xf32, #tpu.memory_space<vmem>>) attributes {dimension_semantics = [#tpu.dimension_semantics<parallel>], iteration_bounds = array<i64: 2>, scalar_prefetch = 0 : i64, scratch_operands = 1 : i64, tpu.core_type = #tpu.core_type<tc>, window_params = [{transform_indices = @transform_0, window_bounds = array<i64: 8, 256>}, {pipeline_mode = #tpu.pipeline_mode<synchronous>, transform_indices = @transform_1, window_bounds = array<i64: 8, 1, 256>}, {pipeline_mode = #tpu.pipeline_mode<synchronous>, transform_indices = @transform_2, window_bounds = array<i64: 16, 72>}, {pipeline_mode = #tpu.pipeline_mode<synchronous>, transform_indices = @transform_3, window_bounds = array<i64: 2, 16, 144>}, {pipeline_mode = #tpu.pipeline_mode<synchronous>, transform_indices = @transform_4, window_bounds = array<i64: 3, 3, 16, 1>}, {pipeline_mode = #tpu.pipeline_mode<synchronous>, transform_indices = @transform_5, window_bounds = array<i64: 2, 9>}, {pipeline_mode = #tpu.pipeline_mode<synchronous>, transform_indices = @transform_6, window_bounds = array<i64: 8, 4>}, {transform_indices = @transform_7, window_bounds = array<i64: 8, 256>}]} {
    %c0 = arith.constant 0 : index
    %c0_0 = arith.constant 0 : index
    %c0_1 = arith.constant 0 : index
    %0 = vector.load %arg2[%c0, %c0_0, %c0_1] : memref<8x1x256xf32, #tpu.memory_space<vmem>>, vector<1x1x256xf32>
    %1 = vector.shape_cast %0 : vector<1x1x256xf32> to vector<1x256xf32>
    %2 = vector.shape_cast %1 : vector<1x256xf32> to vector<1x256xf32>
    %3 = vector.broadcast %2 : vector<1x256xf32> to vector<16x256xf32>
    %c1 = arith.constant 1 : index
    %c0_2 = arith.constant 0 : index
    %c0_3 = arith.constant 0 : index
    %4 = vector.load %arg2[%c1, %c0_2, %c0_3] : memref<8x1x256xf32, #tpu.memory_space<vmem>>, vector<1x1x256xf32>
    %5 = vector.shape_cast %4 : vector<1x1x256xf32> to vector<1x256xf32>
    %6 = vector.shape_cast %5 : vector<1x256xf32> to vector<1x256xf32>
    %7 = vector.broadcast %6 : vector<1x256xf32> to vector<16x256xf32>
    %c2 = arith.constant 2 : index
    %c0_4 = arith.constant 0 : index
    %c0_5 = arith.constant 0 : index
    %8 = vector.load %arg2[%c2, %c0_4, %c0_5] : memref<8x1x256xf32, #tpu.memory_space<vmem>>, vector<1x1x256xf32>
    %9 = vector.shape_cast %8 : vector<1x1x256xf32> to vector<1x256xf32>
    %10 = vector.shape_cast %9 : vector<1x256xf32> to vector<1x256xf32>
    %11 = vector.broadcast %10 : vector<1x256xf32> to vector<16x256xf32>
    %c3 = arith.constant 3 : index
    %c0_6 = arith.constant 0 : index
    %c0_7 = arith.constant 0 : index
    %12 = vector.load %arg2[%c3, %c0_6, %c0_7] : memref<8x1x256xf32, #tpu.memory_space<vmem>>, vector<1x1x256xf32>
    %13 = vector.shape_cast %12 : vector<1x1x256xf32> to vector<1x256xf32>
    %14 = vector.shape_cast %13 : vector<1x256xf32> to vector<1x256xf32>
    %15 = vector.broadcast %14 : vector<1x256xf32> to vector<16x256xf32>
    %c4 = arith.constant 4 : index
    %c0_8 = arith.constant 0 : index
    %c0_9 = arith.constant 0 : index
    %16 = vector.load %arg2[%c4, %c0_8, %c0_9] : memref<8x1x256xf32, #tpu.memory_space<vmem>>, vector<1x1x256xf32>
    %17 = vector.shape_cast %16 : vector<1x1x256xf32> to vector<1x256xf32>
    %18 = vector.shape_cast %17 : vector<1x256xf32> to vector<1x256xf32>
    %19 = vector.broadcast %18 : vector<1x256xf32> to vector<16x256xf32>
    %c5 = arith.constant 5 : index
    %c0_10 = arith.constant 0 : index
    %c0_11 = arith.constant 0 : index
    %20 = vector.load %arg2[%c5, %c0_10, %c0_11] : memref<8x1x256xf32, #tpu.memory_space<vmem>>, vector<1x1x256xf32>
    %21 = vector.shape_cast %20 : vector<1x1x256xf32> to vector<1x256xf32>
    %22 = vector.shape_cast %21 : vector<1x256xf32> to vector<1x256xf32>
    %23 = vector.broadcast %22 : vector<1x256xf32> to vector<16x256xf32>
    %c6 = arith.constant 6 : index
    %c0_12 = arith.constant 0 : index
    %c0_13 = arith.constant 0 : index
    %24 = vector.load %arg2[%c6, %c0_12, %c0_13] : memref<8x1x256xf32, #tpu.memory_space<vmem>>, vector<1x1x256xf32>
    %25 = vector.shape_cast %24 : vector<1x1x256xf32> to vector<1x256xf32>
    %26 = vector.shape_cast %25 : vector<1x256xf32> to vector<1x256xf32>
    %27 = vector.broadcast %26 : vector<1x256xf32> to vector<16x256xf32>
    %c7 = arith.constant 7 : index
    %c0_14 = arith.constant 0 : index
    %c0_15 = arith.constant 0 : index
    %28 = vector.load %arg2[%c7, %c0_14, %c0_15] : memref<8x1x256xf32, #tpu.memory_space<vmem>>, vector<1x1x256xf32>
    %29 = vector.shape_cast %28 : vector<1x1x256xf32> to vector<1x256xf32>
    %30 = vector.shape_cast %29 : vector<1x256xf32> to vector<1x256xf32>
    %31 = vector.broadcast %30 : vector<1x256xf32> to vector<16x256xf32>
    %c0_16 = arith.constant 0 : index
    %c0_17 = arith.constant 0 : index
    %32 = vector.load %arg1[%c0_16, %c0_17] : memref<8x256xf32, #tpu.memory_space<vmem>>, vector<8x256xf32>
    %33 = vector.extract_strided_slice %3 {offsets = [0, 0], sizes = [8, 256], strides = [1, 1]} : vector<16x256xf32> to vector<8x256xf32>
    %34 = vector.extract_strided_slice %7 {offsets = [0, 0], sizes = [8, 256], strides = [1, 1]} : vector<16x256xf32> to vector<8x256xf32>
    %35 = vector.extract_strided_slice %11 {offsets = [0, 0], sizes = [8, 256], strides = [1, 1]} : vector<16x256xf32> to vector<8x256xf32>
    %36 = vector.extract_strided_slice %15 {offsets = [0, 0], sizes = [8, 256], strides = [1, 1]} : vector<16x256xf32> to vector<8x256xf32>
    %37 = vector.extract_strided_slice %19 {offsets = [0, 0], sizes = [8, 256], strides = [1, 1]} : vector<16x256xf32> to vector<8x256xf32>
    %38 = vector.extract_strided_slice %23 {offsets = [0, 0], sizes = [8, 256], strides = [1, 1]} : vector<16x256xf32> to vector<8x256xf32>
    %39 = vector.extract_strided_slice %27 {offsets = [0, 0], sizes = [8, 256], strides = [1, 1]} : vector<16x256xf32> to vector<8x256xf32>
    %40 = vector.extract_strided_slice %31 {offsets = [0, 0], sizes = [8, 256], strides = [1, 1]} : vector<16x256xf32> to vector<8x256xf32>
    %c17_i32 = arith.constant 17 : i32
    %41 = tpu.dynamic_rotate %32 by %c17_i32 dim 1 : vector<8x256xf32>, i32 -> vector<8x256xf32>
    %42 = arith.mulf %41, %33 : vector<8x256xf32>
    %c0_18 = arith.constant 0 : index
    %c0_19 = arith.constant 0 : index
    %43 = vector.load %arg9[%c0_18, %c0_19] : memref<144x256xf32, #tpu.memory_space<vmem>>, vector<8x256xf32>
    tpu.vector_store %arg9[%c0_18, %c0_19], %42 {strides = array<i32>} : memref<144x256xf32, #tpu.memory_space<vmem>>, vector<8x256xf32>,
    %c16_i32 = arith.constant 16 : i32
    %44 = tpu.dynamic_rotate %32 by %c16_i32 dim 1 : vector<8x256xf32>, i32 -> vector<8x256xf32>
    %45 = arith.mulf %44, %34 : vector<8x256xf32>
    %c8 = arith.constant 8 : index
    %c0_20 = arith.constant 0 : index
    %46 = vector.load %arg9[%c8, %c0_20] : memref<144x256xf32, #tpu.memory_space<vmem>>, vector<8x256xf32>
    tpu.vector_store %arg9[%c8, %c0_20], %45 {strides = array<i32>} : memref<144x256xf32, #tpu.memory_space<vmem>>, vector<8x256xf32>,
    %c15_i32 = arith.constant 15 : i32
    %47 = tpu.dynamic_rotate %32 by %c15_i32 dim 1 : vector<8x256xf32>, i32 -> vector<8x256xf32>
    %48 = arith.mulf %47, %35 : vector<8x256xf32>
    %c16 = arith.constant 16 : index
    %c0_21 = arith.constant 0 : index
    %49 = vector.load %arg9[%c16, %c0_21] : memref<144x256xf32, #tpu.memory_space<vmem>>, vector<8x256xf32>
    tpu.vector_store %arg9[%c16, %c0_21], %48 {strides = array<i32>} : memref<144x256xf32, #tpu.memory_space<vmem>>, vector<8x256xf32>,
    %c1_i32 = arith.constant 1 : i32
    %50 = tpu.dynamic_rotate %32 by %c1_i32 dim 1 : vector<8x256xf32>, i32 -> vector<8x256xf32>
    %51 = arith.mulf %50, %36 : vector<8x256xf32>
    %c24 = arith.constant 24 : index
    %c0_22 = arith.constant 0 : index
    %52 = vector.load %arg9[%c24, %c0_22] : memref<144x256xf32, #tpu.memory_space<vmem>>, vector<8x256xf32>
    tpu.vector_store %arg9[%c24, %c0_22], %51 {strides = array<i32>} : memref<144x256xf32, #tpu.memory_space<vmem>>, vector<8x256xf32>,
    %c32 = arith.constant 32 : index
    %c0_23 = arith.constant 0 : index
    %53 = vector.load %arg9[%c32, %c0_23] : memref<144x256xf32, #tpu.memory_space<vmem>>, vector<8x256xf32>
    tpu.vector_store %arg9[%c32, %c0_23], %32 {strides = array<i32>} : memref<144x256xf32, #tpu.memory_space<vmem>>, vector<8x256xf32>,
    %c255_i32 = arith.constant 255 : i32
    %54 = tpu.dynamic_rotate %32 by %c255_i32 dim 1 : vector<8x256xf32>, i32 -> vector<8x256xf32>
    %55 = arith.mulf %54, %37 : vector<8x256xf32>
    %c40 = arith.constant 40 : index
    %c0_24 = arith.constant 0 : index
    %56 = vector.load %arg9[%c40, %c0_24] : memref<144x256xf32, #tpu.memory_space<vmem>>, vector<8x256xf32>
    tpu.vector_store %arg9[%c40, %c0_24], %55 {strides = array<i32>} : memref<144x256xf32, #tpu.memory_space<vmem>>, vector<8x256xf32>,
    %c241_i32 = arith.constant 241 : i32
    %57 = tpu.dynamic_rotate %32 by %c241_i32 dim 1 : vector<8x256xf32>, i32 -> vector<8x256xf32>
    %58 = arith.mulf %57, %38 : vector<8x256xf32>
    %c48 = arith.constant 48 : index
    %c0_25 = arith.constant 0 : index
    %59 = vector.load %arg9[%c48, %c0_25] : memref<144x256xf32, #tpu.memory_space<vmem>>, vector<8x256xf32>
    tpu.vector_store %arg9[%c48, %c0_25], %58 {strides = array<i32>} : memref<144x256xf32, #tpu.memory_space<vmem>>, vector<8x256xf32>,
    %c240_i32 = arith.constant 240 : i32
    %60 = tpu.dynamic_rotate %32 by %c240_i32 dim 1 : vector<8x256xf32>, i32 -> vector<8x256xf32>
    %61 = arith.mulf %60, %39 : vector<8x256xf32>
    %c56 = arith.constant 56 : index
    %c0_26 = arith.constant 0 : index
    %62 = vector.load %arg9[%c56, %c0_26] : memref<144x256xf32, #tpu.memory_space<vmem>>, vector<8x256xf32>
    tpu.vector_store %arg9[%c56, %c0_26], %61 {strides = array<i32>} : memref<144x256xf32, #tpu.memory_space<vmem>>, vector<8x256xf32>,
    %c239_i32 = arith.constant 239 : i32
    %63 = tpu.dynamic_rotate %32 by %c239_i32 dim 1 : vector<8x256xf32>, i32 -> vector<8x256xf32>
    %64 = arith.mulf %63, %40 : vector<8x256xf32>
    %c64 = arith.constant 64 : index
    %c0_27 = arith.constant 0 : index
    %65 = vector.load %arg9[%c64, %c0_27] : memref<144x256xf32, #tpu.memory_space<vmem>>, vector<8x256xf32>
    tpu.vector_store %arg9[%c64, %c0_27], %64 {strides = array<i32>} : memref<144x256xf32, #tpu.memory_space<vmem>>, vector<8x256xf32>,
    %c0_28 = arith.constant 0 : index
    %c0_29 = arith.constant 0 : index
    %66 = vector.load %arg3[%c0_28, %c0_29] : memref<16x72xf32, #tpu.memory_space<vmem>>, vector<16x72xf32>
    %c0_30 = arith.constant 0 : index
    %c0_31 = arith.constant 0 : index
    %67 = vector.load %arg9[%c0_30, %c0_31] : memref<144x256xf32, #tpu.memory_space<vmem>>, vector<72x256xf32>
    %cst = arith.constant dense<0.000000e+00> : vector<16x256xf32>
    %68 = tpu.matmul %66, %67, %cst {dimension_numbers = #tpu.dot_dimension_numbers<[1], [0], [0], [1], [0, 0, 1, 1], [], []>} : vector<16x72xf32>, vector<72x256xf32>, vector<16x256xf32> -> vector<16x256xf32>
    %c0_32 = arith.constant 0 : index
    %c0_33 = arith.constant 0 : index
    %c0_34 = arith.constant 0 : index
    %c0_35 = arith.constant 0 : index
    %69 = vector.load %arg5[%c0_32, %c0_33, %c0_34, %c0_35] : memref<3x3x16x1xf32, #tpu.memory_space<vmem>>, vector<1x3x16x1xf32>
    %70 = vector.shape_cast %69 : vector<1x3x16x1xf32> to vector<3x16x1xf32>
    %71 = vector.extract_strided_slice %70 {offsets = [0, 0, 0], sizes = [1, 16, 1], strides = [1, 1, 1]} : vector<3x16x1xf32> to vector<1x16x1xf32>
    %72 = vector.shape_cast %71 : vector<1x16x1xf32> to vector<16x1xf32>
    %73 = vector.broadcast %72 : vector<16x1xf32> to vector<16x256xf32>
    %74 = arith.mulf %68, %73 : vector<16x256xf32>
    %75 = vector.extract_strided_slice %70 {offsets = [1, 0, 0], sizes = [1, 16, 1], strides = [1, 1, 1]} : vector<3x16x1xf32> to vector<1x16x1xf32>
    %76 = vector.shape_cast %75 : vector<1x16x1xf32> to vector<16x1xf32>
    %77 = vector.broadcast %76 : vector<16x1xf32> to vector<16x256xf32>
    %78 = arith.addf %74, %77 : vector<16x256xf32>
    %cst_36 = arith.constant 0.000000e+00 : f32
    %79 = vector.broadcast %cst_36 : f32 to vector<16x256xf32>
    %80 = arith.cmpf ogt, %78, %79 : vector<16x256xf32>
    %81 = vector.extract_strided_slice %70 {offsets = [2, 0, 0], sizes = [1, 16, 1], strides = [1, 1, 1]} : vector<3x16x1xf32> to vector<1x16x1xf32>
    %82 = vector.shape_cast %81 : vector<1x16x1xf32> to vector<16x1xf32>
    %83 = vector.broadcast %82 : vector<16x1xf32> to vector<16x256xf32>
    %84 = arith.mulf %83, %78 : vector<16x256xf32>
    %85 = arith.select %80, %78, %84 : vector<16x256xi1>, vector<16x256xf32>
    %c17_i32_37 = arith.constant 17 : i32
    %86 = tpu.dynamic_rotate %85 by %c17_i32_37 dim 1 : vector<16x256xf32>, i32 -> vector<16x256xf32>
    %87 = arith.mulf %86, %3 : vector<16x256xf32>
    %c0_38 = arith.constant 0 : index
    %c0_39 = arith.constant 0 : index
    %88 = vector.load %arg9[%c0_38, %c0_39] : memref<144x256xf32, #tpu.memory_space<vmem>>, vector<16x256xf32>
    tpu.vector_store %arg9[%c0_38, %c0_39], %87 {strides = array<i32>} : memref<144x256xf32, #tpu.memory_space<vmem>>, vector<16x256xf32>,
    %c16_i32_40 = arith.constant 16 : i32
    %89 = tpu.dynamic_rotate %85 by %c16_i32_40 dim 1 : vector<16x256xf32>, i32 -> vector<16x256xf32>
    %90 = arith.mulf %89, %7 : vector<16x256xf32>
    %c16_41 = arith.constant 16 : index
    %c0_42 = arith.constant 0 : index
    %91 = vector.load %arg9[%c16_41, %c0_42] : memref<144x256xf32, #tpu.memory_space<vmem>>, vector<16x256xf32>
    tpu.vector_store %arg9[%c16_41, %c0_42], %90 {strides = array<i32>} : memref<144x256xf32, #tpu.memory_space<vmem>>, vector<16x256xf32>,
    %c15_i32_43 = arith.constant 15 : i32
    %92 = tpu.dynamic_rotate %85 by %c15_i32_43 dim 1 : vector<16x256xf32>, i32 -> vector<16x256xf32>
    %93 = arith.mulf %92, %11 : vector<16x256xf32>
    %c32_44 = arith.constant 32 : index
    %c0_45 = arith.constant 0 : index
    %94 = vector.load %arg9[%c32_44, %c0_45] : memref<144x256xf32, #tpu.memory_space<vmem>>, vector<16x256xf32>
    tpu.vector_store %arg9[%c32_44, %c0_45], %93 {strides = array<i32>} : memref<144x256xf32, #tpu.memory_space<vmem>>, vector<16x256xf32>,
    %c1_i32_46 = arith.constant 1 : i32
    %95 = tpu.dynamic_rotate %85 by %c1_i32_46 dim 1 : vector<16x256xf32>, i32 -> vector<16x256xf32>
    %96 = arith.mulf %95, %15 : vector<16x256xf32>
    %c48_47 = arith.constant 48 : index
    %c0_48 = arith.constant 0 : index
    %97 = vector.load %arg9[%c48_47, %c0_48] : memref<144x256xf32, #tpu.memory_space<vmem>>, vector<16x256xf32>
    tpu.vector_store %arg9[%c48_47, %c0_48], %96 {strides = array<i32>} : memref<144x256xf32, #tpu.memory_space<vmem>>, vector<16x256xf32>,
    %c64_49 = arith.constant 64 : index
    %c0_50 = arith.constant 0 : index
    %98 = vector.load %arg9[%c64_49, %c0_50] : memref<144x256xf32, #tpu.memory_space<vmem>>, vector<16x256xf32>
    tpu.vector_store %arg9[%c64_49, %c0_50], %85 {strides = array<i32>} : memref<144x256xf32, #tpu.memory_space<vmem>>, vector<16x256xf32>,
    %c255_i32_51 = arith.constant 255 : i32
    %99 = tpu.dynamic_rotate %85 by %c255_i32_51 dim 1 : vector<16x256xf32>, i32 -> vector<16x256xf32>
    %100 = arith.mulf %99, %19 : vector<16x256xf32>
    %c80 = arith.constant 80 : index
    %c0_52 = arith.constant 0 : index
    %101 = vector.load %arg9[%c80, %c0_52] : memref<144x256xf32, #tpu.memory_space<vmem>>, vector<16x256xf32>
    tpu.vector_store %arg9[%c80, %c0_52], %100 {strides = array<i32>} : memref<144x256xf32, #tpu.memory_space<vmem>>, vector<16x256xf32>,
    %c241_i32_53 = arith.constant 241 : i32
    %102 = tpu.dynamic_rotate %85 by %c241_i32_53 dim 1 : vector<16x256xf32>, i32 -> vector<16x256xf32>
    %103 = arith.mulf %102, %23 : vector<16x256xf32>
    %c96 = arith.constant 96 : index
    %c0_54 = arith.constant 0 : index
    %104 = vector.load %arg9[%c96, %c0_54] : memref<144x256xf32, #tpu.memory_space<vmem>>, vector<16x256xf32>
    tpu.vector_store %arg9[%c96, %c0_54], %103 {strides = array<i32>} : memref<144x256xf32, #tpu.memory_space<vmem>>, vector<16x256xf32>,
    %c240_i32_55 = arith.constant 240 : i32
    %105 = tpu.dynamic_rotate %85 by %c240_i32_55 dim 1 : vector<16x256xf32>, i32 -> vector<16x256xf32>
    %106 = arith.mulf %105, %27 : vector<16x256xf32>
    %c112 = arith.constant 112 : index
    %c0_56 = arith.constant 0 : index
    %107 = vector.load %arg9[%c112, %c0_56] : memref<144x256xf32, #tpu.memory_space<vmem>>, vector<16x256xf32>
    tpu.vector_store %arg9[%c112, %c0_56], %106 {strides = array<i32>} : memref<144x256xf32, #tpu.memory_space<vmem>>, vector<16x256xf32>,
    %c239_i32_57 = arith.constant 239 : i32
    %108 = tpu.dynamic_rotate %85 by %c239_i32_57 dim 1 : vector<16x256xf32>, i32 -> vector<16x256xf32>
    %109 = arith.mulf %108, %31 : vector<16x256xf32>
    %c128 = arith.constant 128 : index
    %c0_58 = arith.constant 0 : index
    %110 = vector.load %arg9[%c128, %c0_58] : memref<144x256xf32, #tpu.memory_space<vmem>>, vector<16x256xf32>
    tpu.vector_store %arg9[%c128, %c0_58], %109 {strides = array<i32>} : memref<144x256xf32, #tpu.memory_space<vmem>>, vector<16x256xf32>,
    %c0_59 = arith.constant 0 : index
    %c0_60 = arith.constant 0 : index
    %c0_61 = arith.constant 0 : index
    %111 = vector.load %arg4[%c0_59, %c0_60, %c0_61] : memref<2x16x144xf32, #tpu.memory_space<vmem>>, vector<1x16x144xf32>
    %112 = vector.shape_cast %111 : vector<1x16x144xf32> to vector<16x144xf32>
    %c0_62 = arith.constant 0 : index
    %c0_63 = arith.constant 0 : index
    %113 = vector.load %arg9[%c0_62, %c0_63] : memref<144x256xf32, #tpu.memory_space<vmem>>, vector<144x256xf32>
    %cst_64 = arith.constant dense<0.000000e+00> : vector<16x256xf32>
    %114 = tpu.matmul %112, %113, %cst_64 {dimension_numbers = #tpu.dot_dimension_numbers<[1], [0], [0], [1], [0, 0, 1, 1], [], []>} : vector<16x144xf32>, vector<144x256xf32>, vector<16x256xf32> -> vector<16x256xf32>
    %c1_65 = arith.constant 1 : index
    %c0_66 = arith.constant 0 : index
    %c0_67 = arith.constant 0 : index
    %c0_68 = arith.constant 0 : index
    %115 = vector.load %arg5[%c1_65, %c0_66, %c0_67, %c0_68] : memref<3x3x16x1xf32, #tpu.memory_space<vmem>>, vector<1x3x16x1xf32>
    %116 = vector.shape_cast %115 : vector<1x3x16x1xf32> to vector<3x16x1xf32>
    %117 = vector.extract_strided_slice %116 {offsets = [0, 0, 0], sizes = [1, 16, 1], strides = [1, 1, 1]} : vector<3x16x1xf32> to vector<1x16x1xf32>
    %118 = vector.shape_cast %117 : vector<1x16x1xf32> to vector<16x1xf32>
    %119 = vector.broadcast %118 : vector<16x1xf32> to vector<16x256xf32>
    %120 = arith.mulf %114, %119 : vector<16x256xf32>
    %121 = vector.extract_strided_slice %116 {offsets = [1, 0, 0], sizes = [1, 16, 1], strides = [1, 1, 1]} : vector<3x16x1xf32> to vector<1x16x1xf32>
    %122 = vector.shape_cast %121 : vector<1x16x1xf32> to vector<16x1xf32>
    %123 = vector.broadcast %122 : vector<16x1xf32> to vector<16x256xf32>
    %124 = arith.addf %120, %123 : vector<16x256xf32>
    %cst_69 = arith.constant 0.000000e+00 : f32
    %125 = vector.broadcast %cst_69 : f32 to vector<16x256xf32>
    %126 = arith.cmpf ogt, %124, %125 : vector<16x256xf32>
    %127 = vector.extract_strided_slice %116 {offsets = [2, 0, 0], sizes = [1, 16, 1], strides = [1, 1, 1]} : vector<3x16x1xf32> to vector<1x16x1xf32>
    %128 = vector.shape_cast %127 : vector<1x16x1xf32> to vector<16x1xf32>
    %129 = vector.broadcast %128 : vector<16x1xf32> to vector<16x256xf32>
    %130 = arith.mulf %129, %124 : vector<16x256xf32>
    %131 = arith.select %126, %124, %130 : vector<16x256xi1>, vector<16x256xf32>
    %c17_i32_70 = arith.constant 17 : i32
    %132 = tpu.dynamic_rotate %131 by %c17_i32_70 dim 1 : vector<16x256xf32>, i32 -> vector<16x256xf32>
    %133 = arith.mulf %132, %3 : vector<16x256xf32>
    %c0_71 = arith.constant 0 : index
    %c0_72 = arith.constant 0 : index
    %134 = vector.load %arg9[%c0_71, %c0_72] : memref<144x256xf32, #tpu.memory_space<vmem>>, vector<16x256xf32>
    tpu.vector_store %arg9[%c0_71, %c0_72], %133 {strides = array<i32>} : memref<144x256xf32, #tpu.memory_space<vmem>>, vector<16x256xf32>,
    %c16_i32_73 = arith.constant 16 : i32
    %135 = tpu.dynamic_rotate %131 by %c16_i32_73 dim 1 : vector<16x256xf32>, i32 -> vector<16x256xf32>
    %136 = arith.mulf %135, %7 : vector<16x256xf32>
    %c16_74 = arith.constant 16 : index
    %c0_75 = arith.constant 0 : index
    %137 = vector.load %arg9[%c16_74, %c0_75] : memref<144x256xf32, #tpu.memory_space<vmem>>, vector<16x256xf32>
    tpu.vector_store %arg9[%c16_74, %c0_75], %136 {strides = array<i32>} : memref<144x256xf32, #tpu.memory_space<vmem>>, vector<16x256xf32>,
    %c15_i32_76 = arith.constant 15 : i32
    %138 = tpu.dynamic_rotate %131 by %c15_i32_76 dim 1 : vector<16x256xf32>, i32 -> vector<16x256xf32>
    %139 = arith.mulf %138, %11 : vector<16x256xf32>
    %c32_77 = arith.constant 32 : index
    %c0_78 = arith.constant 0 : index
    %140 = vector.load %arg9[%c32_77, %c0_78] : memref<144x256xf32, #tpu.memory_space<vmem>>, vector<16x256xf32>
    tpu.vector_store %arg9[%c32_77, %c0_78], %139 {strides = array<i32>} : memref<144x256xf32, #tpu.memory_space<vmem>>, vector<16x256xf32>,
    %c1_i32_79 = arith.constant 1 : i32
    %141 = tpu.dynamic_rotate %131 by %c1_i32_79 dim 1 : vector<16x256xf32>, i32 -> vector<16x256xf32>
    %142 = arith.mulf %141, %15 : vector<16x256xf32>
    %c48_80 = arith.constant 48 : index
    %c0_81 = arith.constant 0 : index
    %143 = vector.load %arg9[%c48_80, %c0_81] : memref<144x256xf32, #tpu.memory_space<vmem>>, vector<16x256xf32>
    tpu.vector_store %arg9[%c48_80, %c0_81], %142 {strides = array<i32>} : memref<144x256xf32, #tpu.memory_space<vmem>>, vector<16x256xf32>,
    %c64_82 = arith.constant 64 : index
    %c0_83 = arith.constant 0 : index
    %144 = vector.load %arg9[%c64_82, %c0_83] : memref<144x256xf32, #tpu.memory_space<vmem>>, vector<16x256xf32>
    tpu.vector_store %arg9[%c64_82, %c0_83], %131 {strides = array<i32>} : memref<144x256xf32, #tpu.memory_space<vmem>>, vector<16x256xf32>,
    %c255_i32_84 = arith.constant 255 : i32
    %145 = tpu.dynamic_rotate %131 by %c255_i32_84 dim 1 : vector<16x256xf32>, i32 -> vector<16x256xf32>
    %146 = arith.mulf %145, %19 : vector<16x256xf32>
    %c80_85 = arith.constant 80 : index
    %c0_86 = arith.constant 0 : index
    %147 = vector.load %arg9[%c80_85, %c0_86] : memref<144x256xf32, #tpu.memory_space<vmem>>, vector<16x256xf32>
    tpu.vector_store %arg9[%c80_85, %c0_86], %146 {strides = array<i32>} : memref<144x256xf32, #tpu.memory_space<vmem>>, vector<16x256xf32>,
    %c241_i32_87 = arith.constant 241 : i32
    %148 = tpu.dynamic_rotate %131 by %c241_i32_87 dim 1 : vector<16x256xf32>, i32 -> vector<16x256xf32>
    %149 = arith.mulf %148, %23 : vector<16x256xf32>
    %c96_88 = arith.constant 96 : index
    %c0_89 = arith.constant 0 : index
    %150 = vector.load %arg9[%c96_88, %c0_89] : memref<144x256xf32, #tpu.memory_space<vmem>>, vector<16x256xf32>
    tpu.vector_store %arg9[%c96_88, %c0_89], %149 {strides = array<i32>} : memref<144x256xf32, #tpu.memory_space<vmem>>, vector<16x256xf32>,
    %c240_i32_90 = arith.constant 240 : i32
    %151 = tpu.dynamic_rotate %131 by %c240_i32_90 dim 1 : vector<16x256xf32>, i32 -> vector<16x256xf32>
    %152 = arith.mulf %151, %27 : vector<16x256xf32>
    %c112_91 = arith.constant 112 : index
    %c0_92 = arith.constant 0 : index
    %153 = vector.load %arg9[%c112_91, %c0_92] : memref<144x256xf32, #tpu.memory_space<vmem>>, vector<16x256xf32>
    tpu.vector_store %arg9[%c112_91, %c0_92], %152 {strides = array<i32>} : memref<144x256xf32, #tpu.memory_space<vmem>>, vector<16x256xf32>,
    %c239_i32_93 = arith.constant 239 : i32
    %154 = tpu.dynamic_rotate %131 by %c239_i32_93 dim 1 : vector<16x256xf32>, i32 -> vector<16x256xf32>
    %155 = arith.mulf %154, %31 : vector<16x256xf32>
    %c128_94 = arith.constant 128 : index
    %c0_95 = arith.constant 0 : index
    %156 = vector.load %arg9[%c128_94, %c0_95] : memref<144x256xf32, #tpu.memory_space<vmem>>, vector<16x256xf32>
    tpu.vector_store %arg9[%c128_94, %c0_95], %155 {strides = array<i32>} : memref<144x256xf32, #tpu.memory_space<vmem>>, vector<16x256xf32>,
    %c1_96 = arith.constant 1 : index
    %c0_97 = arith.constant 0 : index
    %c0_98 = arith.constant 0 : index
    %157 = vector.load %arg4[%c1_96, %c0_97, %c0_98] : memref<2x16x144xf32, #tpu.memory_space<vmem>>, vector<1x16x144xf32>
    %158 = vector.shape_cast %157 : vector<1x16x144xf32> to vector<16x144xf32>
    %c0_99 = arith.constant 0 : index
    %c0_100 = arith.constant 0 : index
    %159 = vector.load %arg9[%c0_99, %c0_100] : memref<144x256xf32, #tpu.memory_space<vmem>>, vector<144x256xf32>
    %cst_101 = arith.constant dense<0.000000e+00> : vector<16x256xf32>
    %160 = tpu.matmul %158, %159, %cst_101 {dimension_numbers = #tpu.dot_dimension_numbers<[1], [0], [0], [1], [0, 0, 1, 1], [], []>} : vector<16x144xf32>, vector<144x256xf32>, vector<16x256xf32> -> vector<16x256xf32>
    %c2_102 = arith.constant 2 : index
    %c0_103 = arith.constant 0 : index
    %c0_104 = arith.constant 0 : index
    %c0_105 = arith.constant 0 : index
    %161 = vector.load %arg5[%c2_102, %c0_103, %c0_104, %c0_105] : memref<3x3x16x1xf32, #tpu.memory_space<vmem>>, vector<1x3x16x1xf32>
    %162 = vector.shape_cast %161 : vector<1x3x16x1xf32> to vector<3x16x1xf32>
    %163 = vector.extract_strided_slice %162 {offsets = [0, 0, 0], sizes = [1, 16, 1], strides = [1, 1, 1]} : vector<3x16x1xf32> to vector<1x16x1xf32>
    %164 = vector.shape_cast %163 : vector<1x16x1xf32> to vector<16x1xf32>
    %165 = vector.broadcast %164 : vector<16x1xf32> to vector<16x256xf32>
    %166 = arith.mulf %160, %165 : vector<16x256xf32>
    %167 = vector.extract_strided_slice %162 {offsets = [1, 0, 0], sizes = [1, 16, 1], strides = [1, 1, 1]} : vector<3x16x1xf32> to vector<1x16x1xf32>
    %168 = vector.shape_cast %167 : vector<1x16x1xf32> to vector<16x1xf32>
    %169 = vector.broadcast %168 : vector<16x1xf32> to vector<16x256xf32>
    %170 = arith.addf %166, %169 : vector<16x256xf32>
    %cst_106 = arith.constant 0.000000e+00 : f32
    %171 = vector.broadcast %cst_106 : f32 to vector<16x256xf32>
    %172 = arith.cmpf ogt, %170, %171 : vector<16x256xf32>
    %173 = vector.extract_strided_slice %162 {offsets = [2, 0, 0], sizes = [1, 16, 1], strides = [1, 1, 1]} : vector<3x16x1xf32> to vector<1x16x1xf32>
    %174 = vector.shape_cast %173 : vector<1x16x1xf32> to vector<16x1xf32>
    %175 = vector.broadcast %174 : vector<16x1xf32> to vector<16x256xf32>
    %176 = arith.mulf %175, %170 : vector<16x256xf32>
    %177 = arith.select %172, %170, %176 : vector<16x256xi1>, vector<16x256xf32>
    %178 = vector.extract_strided_slice %177 {offsets = [0, 0], sizes = [8, 256], strides = [1, 1]} : vector<16x256xf32> to vector<8x256xf32>
    %179 = vector.extract_strided_slice %177 {offsets = [8, 0], sizes = [8, 256], strides = [1, 1]} : vector<16x256xf32> to vector<8x256xf32>
    %cst_107 = arith.constant dense<0.000000e+00> : vector<8xf32>
    %180 = vector.multi_reduction <add>, %179, %cst_107 [1] : vector<8x256xf32> to vector<8xf32>
    %181 = vector.shape_cast %180 : vector<8xf32> to vector<8x1xf32>
    %cst_108 = arith.constant 3.906250e-03 : f32
    %182 = vector.broadcast %cst_108 : f32 to vector<8x1xf32>
    %183 = arith.mulf %181, %182 : vector<8x1xf32>
    %c0_109 = arith.constant 0 : index
    %c0_110 = arith.constant 0 : index
    %184 = vector.load %arg6[%c0_109, %c0_110] : memref<2x9xf32, #tpu.memory_space<vmem>>, vector<2x9xf32>
    %c0_111 = arith.constant 0 : index
    %c0_112 = arith.constant 0 : index
    %185 = vector.load %arg7[%c0_111, %c0_112] : memref<8x4xf32, #tpu.memory_space<vmem>>, vector<8x4xf32>
    %186 = vector.extract_strided_slice %184 {offsets = [0, 8], sizes = [2, 1], strides = [1, 1]} : vector<2x9xf32> to vector<2x1xf32>
    %187 = vector.extract_strided_slice %184 {offsets = [0, 0], sizes = [2, 1], strides = [1, 1]} : vector<2x9xf32> to vector<2x1xf32>
    %188 = vector.extract_strided_slice %183 {offsets = [0, 0], sizes = [1, 1], strides = [1, 1]} : vector<8x1xf32> to vector<1x1xf32>
    %189 = vector.broadcast %188 : vector<1x1xf32> to vector<2x1xf32>
    %190 = arith.mulf %187, %189 : vector<2x1xf32>
    %191 = arith.addf %186, %190 : vector<2x1xf32>
    %192 = vector.extract_strided_slice %184 {offsets = [0, 1], sizes = [2, 1], strides = [1, 1]} : vector<2x9xf32> to vector<2x1xf32>
    %193 = vector.extract_strided_slice %183 {offsets = [1, 0], sizes = [1, 1], strides = [1, 1]} : vector<8x1xf32> to vector<1x1xf32>
    %194 = vector.broadcast %193 : vector<1x1xf32> to vector<2x1xf32>
    %195 = arith.mulf %192, %194 : vector<2x1xf32>
    %196 = arith.addf %191, %195 : vector<2x1xf32>
    %197 = vector.extract_strided_slice %184 {offsets = [0, 2], sizes = [2, 1], strides = [1, 1]} : vector<2x9xf32> to vector<2x1xf32>
    %198 = vector.extract_strided_slice %183 {offsets = [2, 0], sizes = [1, 1], strides = [1, 1]} : vector<8x1xf32> to vector<1x1xf32>
    %199 = vector.broadcast %198 : vector<1x1xf32> to vector<2x1xf32>
    %200 = arith.mulf %197, %199 : vector<2x1xf32>
    %201 = arith.addf %196, %200 : vector<2x1xf32>
    %202 = vector.extract_strided_slice %184 {offsets = [0, 3], sizes = [2, 1], strides = [1, 1]} : vector<2x9xf32> to vector<2x1xf32>
    %203 = vector.extract_strided_slice %183 {offsets = [3, 0], sizes = [1, 1], strides = [1, 1]} : vector<8x1xf32> to vector<1x1xf32>
    %204 = vector.broadcast %203 : vector<1x1xf32> to vector<2x1xf32>
    %205 = arith.mulf %202, %204 : vector<2x1xf32>
    %206 = arith.addf %201, %205 : vector<2x1xf32>
    %207 = vector.extract_strided_slice %184 {offsets = [0, 4], sizes = [2, 1], strides = [1, 1]} : vector<2x9xf32> to vector<2x1xf32>
    %208 = vector.extract_strided_slice %183 {offsets = [4, 0], sizes = [1, 1], strides = [1, 1]} : vector<8x1xf32> to vector<1x1xf32>
    %209 = vector.broadcast %208 : vector<1x1xf32> to vector<2x1xf32>
    %210 = arith.mulf %207, %209 : vector<2x1xf32>
    %211 = arith.addf %206, %210 : vector<2x1xf32>
    %212 = vector.extract_strided_slice %184 {offsets = [0, 5], sizes = [2, 1], strides = [1, 1]} : vector<2x9xf32> to vector<2x1xf32>
    %213 = vector.extract_strided_slice %183 {offsets = [5, 0], sizes = [1, 1], strides = [1, 1]} : vector<8x1xf32> to vector<1x1xf32>
    %214 = vector.broadcast %213 : vector<1x1xf32> to vector<2x1xf32>
    %215 = arith.mulf %212, %214 : vector<2x1xf32>
    %216 = arith.addf %211, %215 : vector<2x1xf32>
    %217 = vector.extract_strided_slice %184 {offsets = [0, 6], sizes = [2, 1], strides = [1, 1]} : vector<2x9xf32> to vector<2x1xf32>
    %218 = vector.extract_strided_slice %183 {offsets = [6, 0], sizes = [1, 1], strides = [1, 1]} : vector<8x1xf32> to vector<1x1xf32>
    %219 = vector.broadcast %218 : vector<1x1xf32> to vector<2x1xf32>
    %220 = arith.mulf %217, %219 : vector<2x1xf32>
    %221 = arith.addf %216, %220 : vector<2x1xf32>
    %222 = vector.extract_strided_slice %184 {offsets = [0, 7], sizes = [2, 1], strides = [1, 1]} : vector<2x9xf32> to vector<2x1xf32>
    %223 = vector.extract_strided_slice %183 {offsets = [7, 0], sizes = [1, 1], strides = [1, 1]} : vector<8x1xf32> to vector<1x1xf32>
    %224 = vector.broadcast %223 : vector<1x1xf32> to vector<2x1xf32>
    %225 = arith.mulf %222, %224 : vector<2x1xf32>
    %226 = arith.addf %221, %225 : vector<2x1xf32>
    %227 = vector.extract_strided_slice %185 {offsets = [0, 3], sizes = [1, 1], strides = [1, 1]} : vector<8x4xf32> to vector<1x1xf32>
    %cst_113 = arith.constant 0.000000e+00 : f32
    %228 = vector.broadcast %cst_113 : f32 to vector<2x1xf32>
    %229 = arith.cmpf ogt, %226, %228 : vector<2x1xf32>
    %230 = vector.broadcast %227 : vector<1x1xf32> to vector<2x1xf32>
    %231 = arith.mulf %230, %226 : vector<2x1xf32>
    %232 = arith.select %229, %226, %231 : vector<2x1xi1>, vector<2x1xf32>
    %233 = vector.extract_strided_slice %185 {offsets = [0, 2], sizes = [8, 1], strides = [1, 1]} : vector<8x4xf32> to vector<8x1xf32>
    %234 = vector.extract_strided_slice %185 {offsets = [0, 0], sizes = [8, 1], strides = [1, 1]} : vector<8x4xf32> to vector<8x1xf32>
    %235 = vector.extract_strided_slice %232 {offsets = [0, 0], sizes = [1, 1], strides = [1, 1]} : vector<2x1xf32> to vector<1x1xf32>
    %236 = vector.broadcast %235 : vector<1x1xf32> to vector<8x1xf32>
    %237 = arith.mulf %234, %236 : vector<8x1xf32>
    %238 = arith.addf %233, %237 : vector<8x1xf32>
    %239 = vector.extract_strided_slice %185 {offsets = [0, 1], sizes = [8, 1], strides = [1, 1]} : vector<8x4xf32> to vector<8x1xf32>
    %240 = vector.extract_strided_slice %232 {offsets = [1, 0], sizes = [1, 1], strides = [1, 1]} : vector<2x1xf32> to vector<1x1xf32>
    %241 = vector.broadcast %240 : vector<1x1xf32> to vector<8x1xf32>
    %242 = arith.mulf %239, %241 : vector<8x1xf32>
    %243 = arith.addf %238, %242 : vector<8x1xf32>
    %244 = arith.negf %243 : vector<8x1xf32>
    %245 = math.exp %244 : vector<8x1xf32>
    %cst_114 = arith.constant 1.000000e+00 : f32
    %246 = vector.broadcast %cst_114 : f32 to vector<8x1xf32>
    %247 = arith.addf %246, %245 : vector<8x1xf32>
    %248 = arith.divf %246, %247 : vector<8x1xf32>
    %249 = vector.broadcast %248 : vector<8x1xf32> to vector<8x256xf32>
    %250 = arith.mulf %249, %179 : vector<8x256xf32>
    %251 = arith.addf %250, %178 : vector<8x256xf32>
    %c0_115 = arith.constant 0 : index
    %c0_116 = arith.constant 0 : index
    %252 = vector.load %arg8[%c0_115, %c0_116] : memref<8x256xf32, #tpu.memory_space<vmem>>, vector<8x256xf32>
    tpu.vector_store %arg8[%c0_115, %c0_116], %251 {strides = array<i32>} : memref<8x256xf32, #tpu.memory_space<vmem>>, vector<8x256xf32>,
    return
  }
  func.func @transform_0(%arg0: i32) -> (i32, i32) {
    %c0_i32 = arith.constant 0 : i32
    %c0_i32_0 = arith.constant 0 : i32
    return %c0_i32, %arg0 : i32, i32
  }
  func.func @transform_1(%arg0: i32) -> (i32, i32, i32) {
    %c0_i32 = arith.constant 0 : i32
    %c0_i32_0 = arith.constant 0 : i32
    %c0_i32_1 = arith.constant 0 : i32
    %c0_i32_2 = arith.constant 0 : i32
    return %c0_i32, %c0_i32_0, %c0_i32_1 : i32, i32, i32
  }
  func.func @transform_2(%arg0: i32) -> (i32, i32) {
    %c0_i32 = arith.constant 0 : i32
    %c0_i32_0 = arith.constant 0 : i32
    %c0_i32_1 = arith.constant 0 : i32
    return %c0_i32, %c0_i32_0 : i32, i32
  }
  func.func @transform_3(%arg0: i32) -> (i32, i32, i32) {
    %c0_i32 = arith.constant 0 : i32
    %c0_i32_0 = arith.constant 0 : i32
    %c0_i32_1 = arith.constant 0 : i32
    %c0_i32_2 = arith.constant 0 : i32
    return %c0_i32, %c0_i32_0, %c0_i32_1 : i32, i32, i32
  }
  func.func @transform_4(%arg0: i32) -> (i32, i32, i32, i32) {
    %c0_i32 = arith.constant 0 : i32
    %c0_i32_0 = arith.constant 0 : i32
    %c0_i32_1 = arith.constant 0 : i32
    %c0_i32_2 = arith.constant 0 : i32
    %c0_i32_3 = arith.constant 0 : i32
    return %c0_i32, %c0_i32_0, %c0_i32_1, %c0_i32_2 : i32, i32, i32, i32
  }
  func.func @transform_5(%arg0: i32) -> (i32, i32) {
    %c0_i32 = arith.constant 0 : i32
    %c0_i32_0 = arith.constant 0 : i32
    %c0_i32_1 = arith.constant 0 : i32
    return %c0_i32, %c0_i32_0 : i32, i32
  }
  func.func @transform_6(%arg0: i32) -> (i32, i32) {
    %c0_i32 = arith.constant 0 : i32
    %c0_i32_0 = arith.constant 0 : i32
    %c0_i32_1 = arith.constant 0 : i32
    return %c0_i32, %c0_i32_0 : i32, i32
  }
  func.func @transform_7(%arg0: i32) -> (i32, i32) {
    %c0_i32 = arith.constant 0 : i32
    %c0_i32_0 = arith.constant 0 : i32
    return %c0_i32, %arg0 : i32, i32
  }
}

</mosaic_0001>

<llo_original>
// kernel: tpu_custom_call.1
$region0: #{tpu_custom_call.1}
  #allocation0 [shape = 'u32[]', space=smem, size = 0x4, offset = 0x4, fixed_abs, tag = 'smem constant byte address 0x4 - core index']
  #allocation1 [shape = 'u32[144,128]{1,0:T(1,128)}', space=vmem, size = 0x12000, scoped, tag = 'internal scratch']
  #allocation2 [shape = 'f32[144,256]{1,0:T(8,128)}', space=vmem, size = 0x24000, scoped, tag = 'scratch operand']
  %s0 = inlined_call_operand.vmem [shape: f32[8,512], index: 0, kind: input, shape index: {}]
  %s1 = inlined_call_operand.vmem [shape: f32[8,1,256], index: 1, kind: input, shape index: {}]
  %s2 = inlined_call_operand.vmem [shape: f32[16,72], index: 2, kind: input, shape index: {}]
  %s3 = inlined_call_operand.vmem [shape: f32[2,16,144], index: 3, kind: input, shape index: {}]
  %s4 = inlined_call_operand.vmem [shape: f32[3,3,16,1], index: 4, kind: input, shape index: {}]
  %s5 = inlined_call_operand.vmem [shape: f32[2,9], index: 5, kind: input, shape index: {}]
  %s6 = inlined_call_operand.vmem [shape: f32[8,4], index: 6, kind: input, shape index: {}]
  %s7 = inlined_call_operand.hbm [shape: f32[8,512], index: 7, kind: output, shape index: {}]
  %s8 = sld [smem:[#allocation0]]
  $region61: #{tpu_custom_call.1} parent=0
    _
  %s10 = ssub.s32 1, %s8
  %s11 = scalar_select 0, %s10, %s8
  $region1: #{tpu_custom_call.1} parent=0
    #allocation3 [shape = 'u8[16384]{0}', space=vmem, size = 0x4000, scoped, tag = 'output window, operand 0']
    #allocation4 [shape = 's32[2]{0}', space=sflag, size = 0x8, scoped, tag = 'scoped memory for tpu_custom_call.1']
    %12 = vsyncpa [#allocation4], 0
    %s13 = scalar_lea.sflag [#allocation4], 1
    %14 = vsyncpa %s13, 0
    loop: start=0, step=1, limit=4
    $region2: #{tpu_custom_call.1} parent=1 // loop_pre_header
      _
    $region3: #{tpu_custom_call.1} parent=1 // loop_header
      %s16 = sphi 0, %s20
      %p17 = scmp.ge.s32.totalorder %s16, 4
      %s26 = sphi 0, %s28
      %s29 = sphi 0, %s26
      %s30 = sphi 0, %s29
      %s46 = sphi 0, %s30
      %s50 = sphi 0, %s50
      %s52 = sphi 0, %s50
      %s53 = sphi 0, %s52
      %s67 = sphi 0, %s53
      %s71 = sphi 0, %s71
      %s73 = sphi 0, %s71
      %s74 = sphi 0, %s73
      %s88 = sphi 0, %s74
      %s92 = sphi 0, %s92
      %s94 = sphi 0, %s92
      %s95 = sphi 0, %s94
      %s109 = sphi 0, %s95
      %s113 = sphi 0, %s113
      %s115 = sphi 0, %s113
      %s116 = sphi 0, %s115
      %s130 = sphi 0, %s116
      %s134 = sphi 0, %s134
      %s136 = sphi 0, %s134
      %s137 = sphi 0, %s136
      %s151 = sphi 0, %s137
      %s155 = sphi 0, %s155
      %s157 = sphi 0, %s155
      %s158 = sphi 0, %s157
      %s172 = sphi 0, %s158
      %s178 = sphi 0, %s180
      %s181 = sphi 0, %s178
      %s182 = sphi 0, %s181
      %s198 = sphi 0, %s182
    $region4: #{tpu_custom_call.1} parent=1 // loop_header_branch
      %19 = sbr.rel (%p17) target = $region8
    $region5: #{tpu_custom_call.1} parent=1 // loop_body
      %s21 = ssub.s32 %s16, 1
      %s22 = ssub.s32 %s16, 2
      %s23 = sadd.s32 %s16, 1
      %s24 = ssub.s32 %s16, %s23
      %p25 = scmp.eq.s32.totalorder %s24, 0
      %s27 = sadd.s32 %s26, 1
      %s28 = scalar_select %p25, %s26, %s27
      %p31 = pneg %p25
      %p32 = scmp.eq.s32.totalorder %s16, 1
      %p33 = por %p31, %p32
      %p34 = scmp.ne.s32.totalorder %s26, %s29
      %p35 = scmp.eq.s32.totalorder %s16, 0
      %p36 = por %p34, %p35
      %p37 = scmp.ne.s32.totalorder %s26, %s29
      %p38 = scmp.eq.s32.totalorder %s21, 1
      %p39 = por %p37, %p38
      %p40 = scmp.ne.s32.totalorder %s29, %s30
      %p41 = scmp.eq.s32.totalorder %s21, 0
      %p42 = por %p40, %p41
      %p43 = scmp.ne.s32.totalorder %s29, %s30
      %p44 = scmp.eq.s32.totalorder %s22, 1
      %p45 = por %p43, %p44
      %p47 = scmp.ne.s32.totalorder %s30, %s46
      %p48 = scmp.eq.s32.totalorder %s22, 0
      %p49 = por %p47, %p48
      %s51 = sadd.s32 %s50, 1
      %p54 = scmp.eq.s32.totalorder %s16, 1
      %p55 = scmp.ne.s32.totalorder %s50, %s52
      %p56 = scmp.eq.s32.totalorder %s16, 0
      %p57 = por %p55, %p56
      %p58 = scmp.ne.s32.totalorder %s50, %s52
      %p59 = scmp.eq.s32.totalorder %s21, 1
      %p60 = por %p58, %p59
      %p61 = scmp.ne.s32.totalorder %s52, %s53
      %p62 = scmp.eq.s32.totalorder %s21, 0
      %p63 = por %p61, %p62
      %p64 = scmp.ne.s32.totalorder %s52, %s53
      %p65 = scmp.eq.s32.totalorder %s22, 1
      %p66 = por %p64, %p65
      %p68 = scmp.ne.s32.totalorder %s53, %s67
      %p69 = scmp.eq.s32.totalorder %s22, 0
      %p70 = por %p68, %p69
      %s72 = sadd.s32 %s71, 1
      %p75 = scmp.eq.s32.totalorder %s16, 1
      %p76 = scmp.ne.s32.totalorder %s71, %s73
      %p77 = scmp.eq.s32.totalorder %s16, 0
      %p78 = por %p76, %p77
      %p79 = scmp.ne.s32.totalorder %s71, %s73
      %p80 = scmp.eq.s32.totalorder %s21, 1
      %p81 = por %p79, %p80
      %p82 = scmp.ne.s32.totalorder %s73, %s74
      %p83 = scmp.eq.s32.totalorder %s21, 0
      %p84 = por %p82, %p83
      %p85 = scmp.ne.s32.totalorder %s73, %s74
      %p86 = scmp.eq.s32.totalorder %s22, 1
      %p87 = por %p85, %p86
      %p89 = scmp.ne.s32.totalorder %s74, %s88
      %p90 = scmp.eq.s32.totalorder %s22, 0
      %p91 = por %p89, %p90
      %s93 = sadd.s32 %s92, 1
      %p96 = scmp.eq.s32.totalorder %s16, 1
      %p97 = scmp.ne.s32.totalorder %s92, %s94
      %p98 = scmp.eq.s32.totalorder %s16, 0
      %p99 = por %p97, %p98
      %p100 = scmp.ne.s32.totalorder %s92, %s94
      %p101 = scmp.eq.s32.totalorder %s21, 1
      %p102 = por %p100, %p101
      %p103 = scmp.ne.s32.totalorder %s94, %s95
      %p104 = scmp.eq.s32.totalorder %s21, 0
      %p105 = por %p103, %p104
      %p106 = scmp.ne.s32.totalorder %s94, %s95
      %p107 = scmp.eq.s32.totalorder %s22, 1
      %p108 = por %p106, %p107
      %p110 = scmp.ne.s32.totalorder %s95, %s109
      %p111 = scmp.eq.s32.totalorder %s22, 0
      %p112 = por %p110, %p111
      %s114 = sadd.s32 %s113, 1
      %p117 = scmp.eq.s32.totalorder %s16, 1
      %p118 = scmp.ne.s32.totalorder %s113, %s115
      %p119 = scmp.eq.s32.totalorder %s16, 0
      %p120 = por %p118, %p119
      %p121 = scmp.ne.s32.totalorder %s113, %s115
      %p122 = scmp.eq.s32.totalorder %s21, 1
      %p123 = por %p121, %p122
      %p124 = scmp.ne.s32.totalorder %s115, %s116
      %p125 = scmp.eq.s32.totalorder %s21, 0
      %p126 = por %p124, %p125
      %p127 = scmp.ne.s32.totalorder %s115, %s116
      %p128 = scmp.eq.s32.totalorder %s22, 1
      %p129 = por %p127, %p128
      %p131 = scmp.ne.s32.totalorder %s116, %s130
      %p132 = scmp.eq.s32.totalorder %s22, 0
      %p133 = por %p131, %p132
      %s135 = sadd.s32 %s134, 1
      %p138 = scmp.eq.s32.totalorder %s16, 1
      %p139 = scmp.ne.s32.totalorder %s134, %s136
      %p140 = scmp.eq.s32.totalorder %s16, 0
      %p141 = por %p139, %p140
      %p142 = scmp.ne.s32.totalorder %s134, %s136
      %p143 = scmp.eq.s32.totalorder %s21, 1
      %p144 = por %p142, %p143
      %p145 = scmp.ne.s32.totalorder %s136, %s137
      %p146 = scmp.eq.s32.totalorder %s21, 0
      %p147 = por %p145, %p146
      %p148 = scmp.ne.s32.totalorder %s136, %s137
      %p149 = scmp.eq.s32.totalorder %s22, 1
      %p150 = por %p148, %p149
      %p152 = scmp.ne.s32.totalorder %s137, %s151
      %p153 = scmp.eq.s32.totalorder %s22, 0
      %p154 = por %p152, %p153
      %s156 = sadd.s32 %s155, 1
      %p159 = scmp.eq.s32.totalorder %s16, 1
      %p160 = scmp.ne.s32.totalorder %s155, %s157
      %p161 = scmp.eq.s32.totalorder %s16, 0
      %p162 = por %p160, %p161
      %p163 = scmp.ne.s32.totalorder %s155, %s157
      %p164 = scmp.eq.s32.totalorder %s21, 1
      %p165 = por %p163, %p164
      %p166 = scmp.ne.s32.totalorder %s157, %s158
      %p167 = scmp.eq.s32.totalorder %s21, 0
      %p168 = por %p166, %p167
      %p169 = scmp.ne.s32.totalorder %s157, %s158
      %p170 = scmp.eq.s32.totalorder %s22, 1
      %p171 = por %p169, %p170
      %p173 = scmp.ne.s32.totalorder %s158, %s172
      %p174 = scmp.eq.s32.totalorder %s22, 0
      %p175 = por %p173, %p174
      %s176 = ssub.s32 %s16, %s23
      %p177 = scmp.eq.s32.totalorder %s176, 0
      %s179 = sadd.s32 %s178, 1
      %s180 = scalar_select %p177, %s178, %s179
      %p183 = pneg %p177
      %p184 = scmp.eq.s32.totalorder %s16, 1
      %p185 = por %p183, %p184
      %p186 = scmp.ne.s32.totalorder %s178, %s181
      %p187 = scmp.eq.s32.totalorder %s16, 0
      %p188 = por %p186, %p187
      %p189 = scmp.ne.s32.totalorder %s178, %s181
      %p190 = scmp.eq.s32.totalorder %s21, 1
      %p191 = por %p189, %p190
      %p192 = scmp.ne.s32.totalorder %s181, %s182
      %p193 = scmp.eq.s32.totalorder %s21, 0
      %p194 = por %p192, %p193
      %p195 = scmp.ne.s32.totalorder %s181, %s182
      %p196 = scmp.eq.s32.totalorder %s22, 1
      %p197 = por %p195, %p196
      %p199 = scmp.ne.s32.totalorder %s182, %s198
      %p200 = scmp.eq.s32.totalorder %s22, 0
      %p201 = por %p199, %p200
      %p202 = scmp.le.s32.totalorder 1, %s16
      %p203 = scmp.lt.s32.totalorder %s16, 3
      %p204 = pnand %p202, %p203
      %p205 = pneg %p204
      // Predicated region
      $region9: #{tpu_custom_call.1} parent=5 // pred_check
        _
      $region10: #{tpu_custom_call.1} parent=5 // pred_check_branch
        %207 = sbr.rel (%p204) target = $region12
      $region11: #{tpu_custom_call.1} parent=5 // pred_region
        %s208 = ssub.s32 %s16, 1
        // Predicated region
        $region13: #{tpu_custom_call.1} parent=11 // pred_check
          %p209 = pneg %p63
        $region14: #{tpu_custom_call.1} parent=11 // pred_check_branch
          %211 = sbr.rel (%p209) target = $region16
        $region15: #{tpu_custom_call.1} parent=11 // pred_region
          _
        $region16: #{tpu_custom_call.1} parent=11 // pred_fallthru
          _
        // Predicated region
        $region17: #{tpu_custom_call.1} parent=11 // pred_check
          %p212 = pneg %p84
        $region18: #{tpu_custom_call.1} parent=11 // pred_check_branch
          %214 = sbr.rel (%p212) target = $region20
        $region19: #{tpu_custom_call.1} parent=11 // pred_region
          _
        $region20: #{tpu_custom_call.1} parent=11 // pred_fallthru
          _
        // Predicated region
        $region21: #{tpu_custom_call.1} parent=11 // pred_check
          %p215 = pneg %p105
        $region22: #{tpu_custom_call.1} parent=11 // pred_check_branch
          %217 = sbr.rel (%p215) target = $region24
        $region23: #{tpu_custom_call.1} parent=11 // pred_region
          _
        $region24: #{tpu_custom_call.1} parent=11 // pred_fallthru
          _
        // Predicated region
        $region25: #{tpu_custom_call.1} parent=11 // pred_check
          %p218 = pneg %p126
        $region26: #{tpu_custom_call.1} parent=11 // pred_check_branch
          %220 = sbr.rel (%p218) target = $region28
        $region27: #{tpu_custom_call.1} parent=11 // pred_region
          _
        $region28: #{tpu_custom_call.1} parent=11 // pred_fallthru
          _
        // Predicated region
        $region29: #{tpu_custom_call.1} parent=11 // pred_check
          %p221 = pneg %p147
        $region30: #{tpu_custom_call.1} parent=11 // pred_check_branch
          %223 = sbr.rel (%p221) target = $region32
        $region31: #{tpu_custom_call.1} parent=11 // pred_region
          _
        $region32: #{tpu_custom_call.1} parent=11 // pred_fallthru
          _
        // Predicated region
        $region33: #{tpu_custom_call.1} parent=11 // pred_check
          %p224 = pneg %p168
        $region34: #{tpu_custom_call.1} parent=11 // pred_check_branch
          %226 = sbr.rel (%p224) target = $region36
        $region35: #{tpu_custom_call.1} parent=11 // pred_region
          _
        $region36: #{tpu_custom_call.1} parent=11 // pred_fallthru
          _
      $region12: #{tpu_custom_call.1} parent=5 // pred_fallthru
        _
      %p227 = scmp.lt.s32.totalorder %s16, 2
      // Predicated region
      $region37: #{tpu_custom_call.1} parent=5 // pred_check
        %p228 = pneg %p227
      $region38: #{tpu_custom_call.1} parent=5 // pred_check_branch
        %230 = sbr.rel (%p228) target = $region40
      $region39: #{tpu_custom_call.1} parent=5 // pred_region
        // Predicated region
        $region41: #{tpu_custom_call.1} parent=39 // pred_check
          %p231 = pneg %p36
        $region42: #{tpu_custom_call.1} parent=39 // pred_check_branch
          %233 = sbr.rel (%p231) target = $region44
        $region43: #{tpu_custom_call.1} parent=39 // pred_region
          %s234 = smul.u32 2, %s16
          %p235 = scmp.lt.s32.totalorder %s234, 3
          %s236 = scalar_select %p235, %s234, 3
          %s237 = smul.addr %s236, 8
          %s238 = scalar_lea.vmem %s0, %s237
          %s239 = smul.u32 2, %s16
        $region44: #{tpu_custom_call.1} parent=39 // pred_fallthru
          _
      $region40: #{tpu_custom_call.1} parent=5 // pred_fallthru
        _
      %p240 = scmp.le.s32.totalorder 1, %s16
      %p241 = scmp.lt.s32.totalorder %s16, 3
      %p242 = pnand %p240, %p241
      %p243 = pneg %p242
      // Predicated region
      $region45: #{tpu_custom_call.1} parent=5 // pred_check
        _
      $region46: #{tpu_custom_call.1} parent=5 // pred_check_branch
        %245 = sbr.rel (%p242) target = $region48
      $region47: #{tpu_custom_call.1} parent=5 // pred_region
        %s246 = ssub.s32 %s16, 1
        %s247 = smul.u32 2, %s21
        %p248 = scmp.lt.s32.totalorder %s247, 3
        %s249 = scalar_select %p248, %s247, 3
        %s250 = smul.addr %s249, 8
        %s251 = scalar_lea.vmem %s0, %s250
        %p252 = pneg %p42
        %p253 = pneg %p39
        %p254 = pneg %p63
        %p255 = pneg %p60
        %p256 = pneg %p84
        %p257 = pneg %p81
        %p258 = pneg %p105
        %p259 = pneg %p102
        %p260 = pneg %p126
        %p261 = pneg %p123
        %p262 = pneg %p147
        %p263 = pneg %p144
        %p264 = pneg %p168
        %p265 = pneg %p165
        %p266 = pneg %p194
        %p267 = pneg %p191
        %s268 = sand.u32 %s181, 1
        %s269 = scalar_lea.sflag [#allocation4], %s268
        %s270 = sand.u32 %s181, 1
        %s271 = smul.addr %s270, 16
        %s272 = scalar_lea.vmem [#allocation3], %s271
        %s273 = smul.u32 2, %s21
        %p274 = scmp.lt.s32.totalorder %s273, 3
        %s275 = scalar_select %p274, %s273, 3
        %s276 = smul.addr %s275, 8
        %s277 = scalar_lea.vmem %s0, %s276
        %s278 = smul.u32 2, %s21
        %s279 = smul.u32 2, %s21
        %v280 = vld [vmem:[%s1] sm:$0x3]
        %v282 = vlaneseq
        %v283 = vshrl.u32 %v282, 7
        %v284 = vsub.s32 0, %v283
        %v285 = vrot.slane %v280, %v284
        %v286 = vlaneseq
        %v287 = vshrl.u32 %v286, 7
        %v288 = vsub.s32 1, %v287
        %v289 = vrot.slane %v280, %v288
        %s292 = scalar_lea.vmem %s1, 2
        %v293 = vld [vmem:[%s292] sm:$0x3]
        %v295 = vlaneseq
        %v296 = vshrl.u32 %v295, 7
        %v297 = vsub.s32 0, %v296
        %v298 = vrot.slane %v293, %v297
        %v299 = vlaneseq
        %v300 = vshrl.u32 %v299, 7
        %v301 = vsub.s32 1, %v300
        %v302 = vrot.slane %v293, %v301
        %s305 = scalar_lea.vmem %s1, 4
        %v306 = vld [vmem:[%s305] sm:$0x3]
        %v308 = vlaneseq
        %v309 = vshrl.u32 %v308, 7
        %v310 = vsub.s32 0, %v309
        %v311 = vrot.slane %v306, %v310
        %v312 = vlaneseq
        %v313 = vshrl.u32 %v312, 7
        %v314 = vsub.s32 1, %v313
        %v315 = vrot.slane %v306, %v314
        %s318 = scalar_lea.vmem %s1, 6
        %v319 = vld [vmem:[%s318] sm:$0x3]
        %v321 = vlaneseq
        %v322 = vshrl.u32 %v321, 7
        %v323 = vsub.s32 0, %v322
        %v324 = vrot.slane %v319, %v323
        %v325 = vlaneseq
        %v326 = vshrl.u32 %v325, 7
        %v327 = vsub.s32 1, %v326
        %v328 = vrot.slane %v319, %v327
        %s331 = scalar_lea.vmem %s1, 8
        %v332 = vld [vmem:[%s331] sm:$0x3]
        %v334 = vlaneseq
        %v335 = vshrl.u32 %v334, 7
        %v336 = vsub.s32 0, %v335
        %v337 = vrot.slane %v332, %v336
        %v338 = vlaneseq
        %v339 = vshrl.u32 %v338, 7
        %v340 = vsub.s32 1, %v339
        %v341 = vrot.slane %v332, %v340
        %s344 = scalar_lea.vmem %s1, 10
        %v345 = vld [vmem:[%s344] sm:$0x3]
        %v347 = vlaneseq
        %v348 = vshrl.u32 %v347, 7
        %v349 = vsub.s32 0, %v348
        %v350 = vrot.slane %v345, %v349
        %v351 = vlaneseq
        %v352 = vshrl.u32 %v351, 7
        %v353 = vsub.s32 1, %v352
        %v354 = vrot.slane %v345, %v353
        %s357 = scalar_lea.vmem %s1, 12
        %v358 = vld [vmem:[%s357] sm:$0x3]
        %v360 = vlaneseq
        %v361 = vshrl.u32 %v360, 7
        %v362 = vsub.s32 0, %v361
        %v363 = vrot.slane %v358, %v362
        %v364 = vlaneseq
        %v365 = vshrl.u32 %v364, 7
        %v366 = vsub.s32 1, %v365
        %v367 = vrot.slane %v358, %v366
        %s370 = scalar_lea.vmem %s1, 14
        %v371 = vld [vmem:[%s370] sm:$0x3]
        %v373 = vlaneseq
        %v374 = vshrl.u32 %v373, 7
        %v375 = vsub.s32 0, %v374
        %v376 = vrot.slane %v371, %v375
        %v377 = vlaneseq
        %v378 = vshrl.u32 %v377, 7
        %v379 = vsub.s32 1, %v378
        %v380 = vrot.slane %v371, %v379
        %v383 = vld [vmem:[%s277] sm:$0xff]
        %v384 = vld [vmem:[%s277 + $0x8] sm:$0xff]
        %385 = vrot.lane.b32.xlu0 %v383, 17
        %v386 = vpop.permute.xlu0 %385
        %387 = vrot.lane.b32.xlu0 %v384, 17
        %v388 = vpop.permute.xlu0 %387
        %v389 = vlaneseq
        %v390 = vand.u32 %v389, 127
        %vm391 = vcmp.lt.s32.totalorder %v390, 17
        %v392 = vsel %vm391, %v386, %v388
        %v393 = vsel %vm391, %v388, %v386
        %v394 = vmul.f32 %v393, %v285
        %v395 = vmul.f32 %v392, %v289
        %396 = vst [vmem:[#allocation2] sm:$0xff] %v394
        %397 = vst [vmem:[#allocation2 + $0x8] sm:$0xff] %v395
        %398 = vrot.lane.b32.xlu0 %v383, 16
        %v399 = vpop.permute.xlu0 %398
        %400 = vrot.lane.b32.xlu0 %v384, 16
        %v401 = vpop.permute.xlu0 %400
        %vm402 = vcmp.lt.s32.totalorder %v390, 16
        %v403 = vsel %vm402, %v399, %v401
        %v404 = vsel %vm402, %v401, %v399
        %v405 = vmul.f32 %v404, %v298
        %v406 = vmul.f32 %v403, %v302
        %407 = vst [vmem:[#allocation2 + $0x10] sm:$0xff] %v405
        %408 = vst [vmem:[#allocation2 + $0x18] sm:$0xff] %v406
        %409 = vrot.lane.b32.xlu0 %v383, 15
        %v410 = vpop.permute.xlu0 %409
        %411 = vrot.lane.b32.xlu0 %v384, 15
        %v412 = vpop.permute.xlu0 %411
        %vm413 = vcmp.lt.s32.totalorder %v390, 15
        %v414 = vsel %vm413, %v410, %v412
        %v415 = vsel %vm413, %v412, %v410
        %v416 = vmul.f32 %v415, %v311
        %v417 = vmul.f32 %v414, %v315
        %418 = vst [vmem:[#allocation2 + $0x20] sm:$0xff] %v416
        %419 = vst [vmem:[#allocation2 + $0x28] sm:$0xff] %v417
        %420 = vrot.lane.b32.xlu0 %v383, 1
        %v421 = vpop.permute.xlu0 %420
        %422 = vrot.lane.b32.xlu0 %v384, 1
        %v423 = vpop.permute.xlu0 %422
        %vm424 = vcmp.lt.s32.totalorder %v390, 1
        %v425 = vsel %vm424, %v421, %v423
        %v426 = vsel %vm424, %v423, %v421
        %v427 = vmul.f32 %v426, %v324
        %v428 = vmul.f32 %v425, %v328
        %429 = vst [vmem:[#allocation2 + $0x30] sm:$0xff] %v427
        %430 = vst [vmem:[#allocation2 + $0x38] sm:$0xff] %v428
        %431 = vst [vmem:[#allocation2 + $0x40] sm:$0xff] %v383
        %432 = vst [vmem:[#allocation2 + $0x48] sm:$0xff] %v384
        %433 = vrot.lane.b32.xlu0 %v383, 127
        %v434 = vpop.permute.xlu0 %433
        %435 = vrot.lane.b32.xlu0 %v384, 127
        %v436 = vpop.permute.xlu0 %435
        %vm437 = vcmp.lt.s32.totalorder %v390, 127
        %v438 = vsel %vm437, %v434, %v436
        %v439 = vsel %vm437, %v436, %v434
        %v440 = vmul.f32 %v438, %v337
        %v441 = vmul.f32 %v439, %v341
        %442 = vst [vmem:[#allocation2 + $0x50] sm:$0xff] %v440
        %443 = vst [vmem:[#allocation2 + $0x58] sm:$0xff] %v441
        %444 = vrot.lane.b32.xlu0 %v383, 113
        %v445 = vpop.permute.xlu0 %444
        %446 = vrot.lane.b32.xlu0 %v384, 113
        %v447 = vpop.permute.xlu0 %446
        %vm448 = vcmp.lt.s32.totalorder %v390, 113
        %v449 = vsel %vm448, %v445, %v447
        %v450 = vsel %vm448, %v447, %v445
        %v451 = vmul.f32 %v449, %v350
        %v452 = vmul.f32 %v450, %v354
        %453 = vst [vmem:[#allocation2 + $0x60] sm:$0xff] %v451
        %454 = vst [vmem:[#allocation2 + $0x68] sm:$0xff] %v452
        %455 = vrot.lane.b32.xlu0 %v383, 112
        %v456 = vpop.permute.xlu0 %455
        %457 = vrot.lane.b32.xlu0 %v384, 112
        %v458 = vpop.permute.xlu0 %457
        %vm459 = vcmp.lt.s32.totalorder %v390, 112
        %v460 = vsel %vm459, %v456, %v458
        %v461 = vsel %vm459, %v458, %v456
        %v462 = vmul.f32 %v460, %v363
        %v463 = vmul.f32 %v461, %v367
        %464 = vst [vmem:[#allocation2 + $0x70] sm:$0xff] %v462
        %465 = vst [vmem:[#allocation2 + $0x78] sm:$0xff] %v463
        %466 = vrot.lane.b32.xlu0 %v383, 111
        %v467 = vpop.permute.xlu0 %466
        %468 = vrot.lane.b32.xlu0 %v384, 111
        %v469 = vpop.permute.xlu0 %468
        %vm470 = vcmp.lt.s32.totalorder %v390, 111
        %v471 = vsel %vm470, %v467, %v469
        %v472 = vsel %vm470, %v469, %v467
        %v473 = vmul.f32 %v471, %v376
        %v474 = vmul.f32 %v472, %v380
        %475 = vst [vmem:[#allocation2 + $0x80] sm:$0xff] %v473
        %476 = vst [vmem:[#allocation2 + $0x88] sm:$0xff] %v474
        %v477 = vld [vmem:[%s2] sm:$0xff]
        %v478 = vld [vmem:[%s2 + $0x8] sm:$0xff]
        %v479 = vld [vmem:[#allocation2] sm:$0xff]
        %v480 = vld [vmem:[#allocation2 + $0x8] sm:$0xff]
        %v481 = vld [vmem:[#allocation2 + $0x10] sm:$0xff]
        %v482 = vld [vmem:[#allocation2 + $0x18] sm:$0xff]
        %v483 = vld [vmem:[#allocation2 + $0x20] sm:$0xff]
        %v484 = vld [vmem:[#allocation2 + $0x28] sm:$0xff]
        %v485 = vld [vmem:[#allocation2 + $0x30] sm:$0xff]
        %v486 = vld [vmem:[#allocation2 + $0x38] sm:$0xff]
        %v487 = vld [vmem:[#allocation2 + $0x40] sm:$0xff]
        %v488 = vld [vmem:[#allocation2 + $0x48] sm:$0xff]
        %v489 = vld [vmem:[#allocation2 + $0x50] sm:$0xff]
        %v490 = vld [vmem:[#allocation2 + $0x58] sm:$0xff]
        %v491 = vld [vmem:[#allocation2 + $0x60] sm:$0xff]
        %v492 = vld [vmem:[#allocation2 + $0x68] sm:$0xff]
        %v493 = vld [vmem:[#allocation2 + $0x70] sm:$0xff]
        %v494 = vld [vmem:[#allocation2 + $0x78] sm:$0xff]
        %v495 = vld [vmem:[#allocation2 + $0x80] sm:$0xff]
        %v496 = vld [vmem:[#allocation2 + $0x88] sm:$0xff]
        %vm497 = vcmask 588800
        %v499 = vsel %vm497, %v477, 0
        %v502 = vsel %vm497, %v478, 0
        %504 = vmatprep.subr.mxu0 %v480
        %505 = vmatpush1.msra.mxu0 %v479
        %506 = vmatprep.subr.mxu0 %v482
        %507 = vmatpush1.msra.mxu0 %v481
        %508 = vmatprep.subr.mxu0 %v484
        %509 = vmatpush1.msra.mxu0 %v483
        %510 = vmatprep.subr.mxu0 %v486
        %511 = vmatpush1.msra.mxu0 %v485
        %512 = vmatprep.subr.mxu0 %v488
        %513 = vmatpush1.msra.mxu0 %v487
        %514 = vmatprep.subr.mxu0 %v490
        %515 = vmatpush1.msra.mxu0 %v489
        %516 = vmatprep.subr.mxu0 %v492
        %517 = vmatpush1.msra.mxu0 %v491
        %518 = vmatprep.subr.mxu0 %v494
        %519 = vmatpush1.msra.mxu0 %v493
        %520 = vmatprep.subr.mxu0 %v496
        %521 = vmatpush1.msra.mxu0 %v495
        %522 = vmatprep.subr.mxu0 0.0
        %523 = vmatpush1.msra.mxu0 0.0
        %524 = vmatprep.subr.mxu0 0.0
        %525 = vmatpush1.msra.mxu0 0.0
        %526 = vmatprep.subr.mxu0 0.0
        %527 = vmatpush1.msra.mxu0 0.0
        %528 = vmatprep.subr.mxu0 0.0
        %529 = vmatpush1.msra.mxu0 0.0
        %530 = vmatprep.subr.mxu0 0.0
        %531 = vmatpush1.msra.mxu0 0.0
        %532 = vmatprep.subr.mxu0 0.0
        %533 = vmatpush1.msra.mxu0 0.0
        %534 = vmatprep.subr.mxu0 0.0
        %535 = vmatpush1.msra.mxu0 0.0
        %536 = vmatprep.subr.mxu0 0.0
        %537 = vmatpush1.msra.mxu0 0.0
        %538 = vmatprep.subr.mxu0 0.0
        %539 = vmatpush1.msra.mxu0 0.0
        %540 = vmatprep.subr.mxu0 0.0
        %541 = vmatpush1.msra.mxu0 0.0
        %542 = vmatprep.subr.mxu0 0.0
        %543 = vmatpush1.msra.mxu0 0.0
        %544 = vmatprep.subr.mxu0 0.0
        %545 = vmatpush1.msra.mxu0 0.0
        %546 = vmatprep.subr.mxu0 0.0
        %547 = vmatpush1.msra.mxu0 0.0
        %548 = vmatprep.subr.mxu0 0.0
        %549 = vmatpush1.msra.mxu0 0.0
        %550 = vmatprep.subr.mxu0 0.0
        %551 = vmatpush1.msra.mxu0 0.0
        %552 = vmatprep.subr.mxu0 0.0
        %553 = vmatpush1.msra.mxu0 0.0
        %554 = vmatprep.subr.mxu0 0.0
        %555 = vmatpush1.msra.mxu0 0.0
        %556 = vmatprep.subr.mxu0 0.0
        %557 = vmatpush1.msra.mxu0 0.0
        %558 = vmatprep.subr.mxu0 0.0
        %559 = vmatpush1.msra.mxu0 0.0
        %560 = vmatprep.subr.mxu0 0.0
        %561 = vmatpush1.msra.mxu0 0.0
        %562 = vmatprep.subr.mxu0 0.0
        %563 = vmatpush1.msra.mxu0 0.0
        %564 = vmatprep.subr.mxu0 0.0
        %565 = vmatpush1.msra.mxu0 0.0
        %566 = vmatprep.subr.mxu0 0.0
        %567 = vmatpush1.msra.mxu0 0.0
        %568 = vmatprep.mubr.f32.mxu0 0.0
        %569 = vmatmul.mubr.f32.gmra.mrb[0].mxu0 %v499
        %v570 = vpop.f32.mrb[0].mxu0
        %v571 = vadd.f32 0.0, %v570
        %v572 = vpop.f32.mrb[0].mxu0
        %v573 = vadd.f32 0.0, %v572
        %574 = vmatprep.mubr.f32.mxu0 0.0
        %575 = vmatmul.mubr.f32.gmra.mrb[0].mxu0 %v502
        %v576 = vpop.f32.mrb[0].mxu0
        %v577 = vadd.f32 0.0, %v576
        %v578 = vpop.f32.mrb[0].mxu0
        %v579 = vadd.f32 0.0, %v578
        %580 = vdwg.mxu0
        %v581 = vld [vmem:[%s4] sm:$0xff]
        %v582 = vld [vmem:[%s4 + $0x8] sm:$0xff]
        %v583 = vld [vmem:[%s4 + $0x10] sm:$0xff]
        %v584 = vld [vmem:[%s4 + $0x18] sm:$0xff]
        %v585 = vld [vmem:[%s4 + $0x20] sm:$0xff]
        %v586 = vld [vmem:[%s4 + $0x28] sm:$0xff]
        %588 = vset.pattern.permute.xlu0 0
        %589 = vperm.xlu0 %588, %v581
        %v590 = vpop.permute.xlu0 %589
        %593 = vset.pattern.permute.xlu0 0
        %594 = vperm.xlu0 %593, %v582
        %v595 = vpop.permute.xlu0 %594
        %v597 = vmul.f32 %v571, %v590
        %v598 = vmul.f32 %v573, %v590
        %v599 = vmul.f32 %v577, %v595
        %v600 = vmul.f32 %v579, %v595
        %602 = vset.pattern.permute.xlu0 0
        %603 = vperm.xlu0 %602, %v583
        %v604 = vpop.permute.xlu0 %603
        %607 = vset.pattern.permute.xlu0 0
        %608 = vperm.xlu0 %607, %v584
        %v609 = vpop.permute.xlu0 %608
        %v611 = vadd.f32 %v597, %v604
        %v612 = vadd.f32 %v598, %v604
        %v613 = vadd.f32 %v599, %v609
        %v614 = vadd.f32 %v600, %v609
        %vm615 = vcmp.gt.f32.partialorder %v611, 0.0
        %vm616 = vcmp.gt.f32.partialorder %v612, 0.0
        %vm617 = vcmp.gt.f32.partialorder %v613, 0.0
        %vm618 = vcmp.gt.f32.partialorder %v614, 0.0
        %620 = vset.pattern.permute.xlu0 0
        %621 = vperm.xlu0 %620, %v585
        %v622 = vpop.permute.xlu0 %621
        %625 = vset.pattern.permute.xlu0 0
        %626 = vperm.xlu0 %625, %v586
        %v627 = vpop.permute.xlu0 %626
        %v629 = vmul.f32 %v622, %v611
        %v630 = vmul.f32 %v622, %v612
        %v631 = vmul.f32 %v627, %v613
        %v632 = vmul.f32 %v627, %v614
        %v633 = vsel %vm615, %v611, %v629
        %v634 = vsel %vm616, %v612, %v630
        %v635 = vsel %vm617, %v613, %v631
        %v636 = vsel %vm618, %v614, %v632
        %637 = vrot.lane.b32.xlu0 %v633, 17
        %v638 = vpop.permute.xlu0 %637
        %639 = vrot.lane.b32.xlu0 %v635, 17
        %v640 = vpop.permute.xlu0 %639
        %641 = vrot.lane.b32.xlu0 %v634, 17
        %v642 = vpop.permute.xlu0 %641
        %643 = vrot.lane.b32.xlu0 %v636, 17
        %v644 = vpop.permute.xlu0 %643
        %v645 = vsel %vm391, %v638, %v642
        %v646 = vsel %vm391, %v640, %v644
        %v647 = vsel %vm391, %v642, %v638
        %v648 = vsel %vm391, %v644, %v640
        %v649 = vmul.f32 %v647, %v285
        %v650 = vmul.f32 %v645, %v289
        %v651 = vmul.f32 %v648, %v285
        %v652 = vmul.f32 %v646, %v289
        %653 = vst [vmem:[#allocation2] sm:$0xff] %v649
        %654 = vst [vmem:[#allocation2 + $0x8] sm:$0xff] %v650
        %655 = vst [vmem:[#allocation2 + $0x10] sm:$0xff] %v651
        %656 = vst [vmem:[#allocation2 + $0x18] sm:$0xff] %v652
        %657 = vrot.lane.b32.xlu0 %v633, 16
        %v658 = vpop.permute.xlu0 %657
        %659 = vrot.lane.b32.xlu0 %v635, 16
        %v660 = vpop.permute.xlu0 %659
        %661 = vrot.lane.b32.xlu0 %v634, 16
        %v662 = vpop.permute.xlu0 %661
        %663 = vrot.lane.b32.xlu0 %v636, 16
        %v664 = vpop.permute.xlu0 %663
        %v665 = vsel %vm402, %v658, %v662
        %v666 = vsel %vm402, %v660, %v664
        %v667 = vsel %vm402, %v662, %v658
        %v668 = vsel %vm402, %v664, %v660
        %v669 = vmul.f32 %v667, %v298
        %v670 = vmul.f32 %v665, %v302
        %v671 = vmul.f32 %v668, %v298
        %v672 = vmul.f32 %v666, %v302
        %673 = vst [vmem:[#allocation2 + $0x20] sm:$0xff] %v669
        %674 = vst [vmem:[#allocation2 + $0x28] sm:$0xff] %v670
        %675 = vst [vmem:[#allocation2 + $0x30] sm:$0xff] %v671
        %676 = vst [vmem:[#allocation2 + $0x38] sm:$0xff] %v672
        %677 = vrot.lane.b32.xlu0 %v633, 15
        %v678 = vpop.permute.xlu0 %677
        %679 = vrot.lane.b32.xlu0 %v635, 15
        %v680 = vpop.permute.xlu0 %679
        %681 = vrot.lane.b32.xlu0 %v634, 15
        %v682 = vpop.permute.xlu0 %681
        %683 = vrot.lane.b32.xlu0 %v636, 15
        %v684 = vpop.permute.xlu0 %683
        %v685 = vsel %vm413, %v678, %v682
        %v686 = vsel %vm413, %v680, %v684
        %v687 = vsel %vm413, %v682, %v678
        %v688 = vsel %vm413, %v684, %v680
        %v689 = vmul.f32 %v687, %v311
        %v690 = vmul.f32 %v685, %v315
        %v691 = vmul.f32 %v688, %v311
        %v692 = vmul.f32 %v686, %v315
        %693 = vst [vmem:[#allocation2 + $0x40] sm:$0xff] %v689
        %694 = vst [vmem:[#allocation2 + $0x48] sm:$0xff] %v690
        %695 = vst [vmem:[#allocation2 + $0x50] sm:$0xff] %v691
        %696 = vst [vmem:[#allocation2 + $0x58] sm:$0xff] %v692
        %697 = vrot.lane.b32.xlu0 %v633, 1
        %v698 = vpop.permute.xlu0 %697
        %699 = vrot.lane.b32.xlu0 %v635, 1
        %v700 = vpop.permute.xlu0 %699
        %701 = vrot.lane.b32.xlu0 %v634, 1
        %v702 = vpop.permute.xlu0 %701
        %703 = vrot.lane.b32.xlu0 %v636, 1
        %v704 = vpop.permute.xlu0 %703
        %v705 = vsel %vm424, %v698, %v702
        %v706 = vsel %vm424, %v700, %v704
        %v707 = vsel %vm424, %v702, %v698
        %v708 = vsel %vm424, %v704, %v700
        %v709 = vmul.f32 %v707, %v324
        %v710 = vmul.f32 %v705, %v328
        %v711 = vmul.f32 %v708, %v324
        %v712 = vmul.f32 %v706, %v328
        %713 = vst [vmem:[#allocation2 + $0x60] sm:$0xff] %v709
        %714 = vst [vmem:[#allocation2 + $0x68] sm:$0xff] %v710
        %715 = vst [vmem:[#allocation2 + $0x70] sm:$0xff] %v711
        %716 = vst [vmem:[#allocation2 + $0x78] sm:$0xff] %v712
        %717 = vst [vmem:[#allocation2 + $0x80] sm:$0xff] %v633
        %718 = vst [vmem:[#allocation2 + $0x88] sm:$0xff] %v634
        %719 = vst [vmem:[#allocation2 + $0x90] sm:$0xff] %v635
        %720 = vst [vmem:[#allocation2 + $0x98] sm:$0xff] %v636
        %721 = vrot.lane.b32.xlu0 %v633, 127
        %v722 = vpop.permute.xlu0 %721
        %723 = vrot.lane.b32.xlu0 %v635, 127
        %v724 = vpop.permute.xlu0 %723
        %725 = vrot.lane.b32.xlu0 %v634, 127
        %v726 = vpop.permute.xlu0 %725
        %727 = vrot.lane.b32.xlu0 %v636, 127
        %v728 = vpop.permute.xlu0 %727
        %v729 = vsel %vm437, %v722, %v726
        %v730 = vsel %vm437, %v724, %v728
        %v731 = vsel %vm437, %v726, %v722
        %v732 = vsel %vm437, %v728, %v724
        %v733 = vmul.f32 %v729, %v337
        %v734 = vmul.f32 %v731, %v341
        %v735 = vmul.f32 %v730, %v337
        %v736 = vmul.f32 %v732, %v341
        %737 = vst [vmem:[#allocation2 + $0xa0] sm:$0xff] %v733
        %738 = vst [vmem:[#allocation2 + $0xa8] sm:$0xff] %v734
        %739 = vst [vmem:[#allocation2 + $0xb0] sm:$0xff] %v735
        %740 = vst [vmem:[#allocation2 + $0xb8] sm:$0xff] %v736
        %741 = vrot.lane.b32.xlu0 %v633, 113
        %v742 = vpop.permute.xlu0 %741
        %743 = vrot.lane.b32.xlu0 %v635, 113
        %v744 = vpop.permute.xlu0 %743
        %745 = vrot.lane.b32.xlu0 %v634, 113
        %v746 = vpop.permute.xlu0 %745
        %747 = vrot.lane.b32.xlu0 %v636, 113
        %v748 = vpop.permute.xlu0 %747
        %v749 = vsel %vm448, %v742, %v746
        %v750 = vsel %vm448, %v744, %v748
        %v751 = vsel %vm448, %v746, %v742
        %v752 = vsel %vm448, %v748, %v744
        %v753 = vmul.f32 %v749, %v350
        %v754 = vmul.f32 %v751, %v354
        %v755 = vmul.f32 %v750, %v350
        %v756 = vmul.f32 %v752, %v354
        %757 = vst [vmem:[#allocation2 + $0xc0] sm:$0xff] %v753
        %758 = vst [vmem:[#allocation2 + $0xc8] sm:$0xff] %v754
        %759 = vst [vmem:[#allocation2 + $0xd0] sm:$0xff] %v755
        %760 = vst [vmem:[#allocation2 + $0xd8] sm:$0xff] %v756
        %761 = vrot.lane.b32.xlu0 %v633, 112
        %v762 = vpop.permute.xlu0 %761
        %763 = vrot.lane.b32.xlu0 %v635, 112
        %v764 = vpop.permute.xlu0 %763
        %765 = vrot.lane.b32.xlu0 %v634, 112
        %v766 = vpop.permute.xlu0 %765
        %767 = vrot.lane.b32.xlu0 %v636, 112
        %v768 = vpop.permute.xlu0 %767
        %v769 = vsel %vm459, %v762, %v766
        %v770 = vsel %vm459, %v764, %v768
        %v771 = vsel %vm459, %v766, %v762
        %v772 = vsel %vm459, %v768, %v764
        %v773 = vmul.f32 %v769, %v363
        %v774 = vmul.f32 %v771, %v367
        %v775 = vmul.f32 %v770, %v363
        %v776 = vmul.f32 %v772, %v367
        %777 = vst [vmem:[#allocation2 + $0xe0] sm:$0xff] %v773
        %778 = vst [vmem:[#allocation2 + $0xe8] sm:$0xff] %v774
        %779 = vst [vmem:[#allocation2 + $0xf0] sm:$0xff] %v775
        %780 = vst [vmem:[#allocation2 + $0xf8] sm:$0xff] %v776
        %781 = vrot.lane.b32.xlu0 %v633, 111
        %v782 = vpop.permute.xlu0 %781
        %783 = vrot.lane.b32.xlu0 %v635, 111
        %v784 = vpop.permute.xlu0 %783
        %785 = vrot.lane.b32.xlu0 %v634, 111
        %v786 = vpop.permute.xlu0 %785
        %787 = vrot.lane.b32.xlu0 %v636, 111
        %v788 = vpop.permute.xlu0 %787
        %v789 = vsel %vm470, %v782, %v786
        %v790 = vsel %vm470, %v784, %v788
        %v791 = vsel %vm470, %v786, %v782
        %v792 = vsel %vm470, %v788, %v784
        %v793 = vmul.f32 %v789, %v376
        %v794 = vmul.f32 %v791, %v380
        %v795 = vmul.f32 %v790, %v376
        %v796 = vmul.f32 %v792, %v380
        %797 = vst [vmem:[#allocation2 + $0x100] sm:$0xff] %v793
        %798 = vst [vmem:[#allocation2 + $0x108] sm:$0xff] %v794
        %799 = vst [vmem:[#allocation2 + $0x110] sm:$0xff] %v795
        %800 = vst [vmem:[#allocation2 + $0x118] sm:$0xff] %v796
        %v801 = vld [vmem:[%s3] sm:$0xff]
        %v802 = vld [vmem:[%s3 + $0x8] sm:$0xff]
        %v803 = vld [vmem:[%s3 + $0x10] sm:$0xff]
        %v804 = vld [vmem:[%s3 + $0x18] sm:$0xff]
        %v805 = vld [vmem:[#allocation2] sm:$0xff]
        %v806 = vld [vmem:[#allocation2 + $0x8] sm:$0xff]
        %v807 = vld [vmem:[#allocation2 + $0x10] sm:$0xff]
        %v808 = vld [vmem:[#allocation2 + $0x18] sm:$0xff]
        %v809 = vld [vmem:[#allocation2 + $0x20] sm:$0xff]
        %v810 = vld [vmem:[#allocation2 + $0x28] sm:$0xff]
        %v811 = vld [vmem:[#allocation2 + $0x30] sm:$0xff]
        %v812 = vld [vmem:[#allocation2 + $0x38] sm:$0xff]
        %v813 = vld [vmem:[#allocation2 + $0x40] sm:$0xff]
        %v814 = vld [vmem:[#allocation2 + $0x48] sm:$0xff]
        %v815 = vld [vmem:[#allocation2 + $0x50] sm:$0xff]
        %v816 = vld [vmem:[#allocation2 + $0x58] sm:$0xff]
        %v817 = vld [vmem:[#allocation2 + $0x60] sm:$0xff]
        %v818 = vld [vmem:[#allocation2 + $0x68] sm:$0xff]
        %v819 = vld [vmem:[#allocation2 + $0x70] sm:$0xff]
        %v820 = vld [vmem:[#allocation2 + $0x78] sm:$0xff]
        %v821 = vld [vmem:[#allocation2 + $0x80] sm:$0xff]
        %v822 = vld [vmem:[#allocation2 + $0x88] sm:$0xff]
        %v823 = vld [vmem:[#allocation2 + $0x90] sm:$0xff]
        %v824 = vld [vmem:[#allocation2 + $0x98] sm:$0xff]
        %v825 = vld [vmem:[#allocation2 + $0xa0] sm:$0xff]
        %v826 = vld [vmem:[#allocation2 + $0xa8] sm:$0xff]
        %v827 = vld [vmem:[#allocation2 + $0xb0] sm:$0xff]
        %v828 = vld [vmem:[#allocation2 + $0xb8] sm:$0xff]
        %v829 = vld [vmem:[#allocation2 + $0xc0] sm:$0xff]
        %v830 = vld [vmem:[#allocation2 + $0xc8] sm:$0xff]
        %v831 = vld [vmem:[#allocation2 + $0xd0] sm:$0xff]
        %v832 = vld [vmem:[#allocation2 + $0xd8] sm:$0xff]
        %v833 = vld [vmem:[#allocation2 + $0xe0] sm:$0xff]
        %v834 = vld [vmem:[#allocation2 + $0xe8] sm:$0xff]
        %v835 = vld [vmem:[#allocation2 + $0xf0] sm:$0xff]
        %v836 = vld [vmem:[#allocation2 + $0xf8] sm:$0xff]
        %v837 = vld [vmem:[#allocation2 + $0x100] sm:$0xff]
        %v838 = vld [vmem:[#allocation2 + $0x108] sm:$0xff]
        %v839 = vld [vmem:[#allocation2 + $0x110] sm:$0xff]
        %v840 = vld [vmem:[#allocation2 + $0x118] sm:$0xff]
        %vm841 = vcmask 130048
        %v843 = vsel %vm841, %v802, 0
        %v846 = vsel %vm841, %v804, 0
        %848 = vmatprep.subr.mxu0 %v806
        %849 = vmatpush1.msra.mxu0 %v805
        %850 = vmatprep.subr.mxu0 %v808
        %851 = vmatpush1.msra.mxu0 %v807
        %852 = vmatprep.subr.mxu0 %v810
        %853 = vmatpush1.msra.mxu0 %v809
        %854 = vmatprep.subr.mxu0 %v812
        %855 = vmatpush1.msra.mxu0 %v811
        %856 = vmatprep.subr.mxu0 %v814
        %857 = vmatpush1.msra.mxu0 %v813
        %858 = vmatprep.subr.mxu0 %v816
        %859 = vmatpush1.msra.mxu0 %v815
        %860 = vmatprep.subr.mxu0 %v818
        %861 = vmatpush1.msra.mxu0 %v817
        %862 = vmatprep.subr.mxu0 %v820
        %863 = vmatpush1.msra.mxu0 %v819
        %864 = vmatprep.subr.mxu0 %v822
        %865 = vmatpush1.msra.mxu0 %v821
        %866 = vmatprep.subr.mxu0 %v824
        %867 = vmatpush1.msra.mxu0 %v823
        %868 = vmatprep.subr.mxu0 %v826
        %869 = vmatpush1.msra.mxu0 %v825
        %870 = vmatprep.subr.mxu0 %v828
        %871 = vmatpush1.msra.mxu0 %v827
        %872 = vmatprep.subr.mxu0 %v830
        %873 = vmatpush1.msra.mxu0 %v829
        %874 = vmatprep.subr.mxu0 %v832
        %875 = vmatpush1.msra.mxu0 %v831
        %876 = vmatprep.subr.mxu0 %v834
        %877 = vmatpush1.msra.mxu0 %v833
        %878 = vmatprep.subr.mxu0 %v836
        %879 = vmatpush1.msra.mxu0 %v835
        %880 = vmatprep.subr.mxu0 %v838
        %881 = vmatpush1.msra.mxu0 %v837
        %882 = vmatprep.subr.mxu0 %v840
        %883 = vmatpush1.msra.mxu0 %v839
        %884 = vmatprep.subr.mxu0 0.0
        %885 = vmatpush1.msra.mxu0 0.0
        %886 = vmatprep.subr.mxu0 0.0
        %887 = vmatpush1.msra.mxu0 0.0
        %888 = vmatprep.subr.mxu0 0.0
        %889 = vmatpush1.msra.mxu0 0.0
        %890 = vmatprep.subr.mxu0 0.0
        %891 = vmatpush1.msra.mxu0 0.0
        %892 = vmatprep.subr.mxu0 0.0
        %893 = vmatpush1.msra.mxu0 0.0
        %894 = vmatprep.subr.mxu0 0.0
        %895 = vmatpush1.msra.mxu0 0.0
        %896 = vmatprep.subr.mxu0 0.0
        %897 = vmatpush1.msra.mxu0 0.0
        %898 = vmatprep.subr.mxu0 0.0
        %899 = vmatpush1.msra.mxu0 0.0
        %900 = vmatprep.subr.mxu0 0.0
        %901 = vmatpush1.msra.mxu0 0.0
        %902 = vmatprep.subr.mxu0 0.0
        %903 = vmatpush1.msra.mxu0 0.0
        %904 = vmatprep.subr.mxu0 0.0
        %905 = vmatpush1.msra.mxu0 0.0
        %906 = vmatprep.subr.mxu0 0.0
        %907 = vmatpush1.msra.mxu0 0.0
        %908 = vmatprep.subr.mxu0 0.0
        %909 = vmatpush1.msra.mxu0 0.0
        %910 = vmatprep.subr.mxu0 0.0
        %911 = vmatpush1.msra.mxu0 0.0
        %912 = vmatprep.mubr.f32.mxu0 %v843
        %913 = vmatmul.mubr.f32.gmra.mrb[0].mxu0 %v801
        %v914 = vpop.f32.mrb[0].mxu0
        %v915 = vadd.f32 0.0, %v914
        %v916 = vpop.f32.mrb[0].mxu0
        %v917 = vadd.f32 0.0, %v916
        %918 = vmatprep.mubr.f32.mxu0 %v846
        %919 = vmatmul.mubr.f32.gmra.mrb[0].mxu0 %v803
        %v920 = vpop.f32.mrb[0].mxu0
        %v921 = vadd.f32 0.0, %v920
        %v922 = vpop.f32.mrb[0].mxu0
        %v923 = vadd.f32 0.0, %v922
        %924 = vdwg.mxu0
        %s925 = scalar_lea.vmem %s4, 48
        %v926 = vld [vmem:[%s925] sm:$0xff]
        %v927 = vld [vmem:[%s925 + $0x8] sm:$0xff]
        %v928 = vld [vmem:[%s925 + $0x10] sm:$0xff]
        %v929 = vld [vmem:[%s925 + $0x18] sm:$0xff]
        %v930 = vld [vmem:[%s925 + $0x20] sm:$0xff]
        %v931 = vld [vmem:[%s925 + $0x28] sm:$0xff]
        %933 = vset.pattern.permute.xlu0 0
        %934 = vperm.xlu0 %933, %v926
        %v935 = vpop.permute.xlu0 %934
        %938 = vset.pattern.permute.xlu0 0
        %939 = vperm.xlu0 %938, %v927
        %v940 = vpop.permute.xlu0 %939
        %v942 = vmul.f32 %v915, %v935
        %v943 = vmul.f32 %v917, %v935
        %v944 = vmul.f32 %v921, %v940
        %v945 = vmul.f32 %v923, %v940
        %947 = vset.pattern.permute.xlu0 0
        %948 = vperm.xlu0 %947, %v928
        %v949 = vpop.permute.xlu0 %948
        %952 = vset.pattern.permute.xlu0 0
        %953 = vperm.xlu0 %952, %v929
        %v954 = vpop.permute.xlu0 %953
        %v956 = vadd.f32 %v942, %v949
        %v957 = vadd.f32 %v943, %v949
        %v958 = vadd.f32 %v944, %v954
        %v959 = vadd.f32 %v945, %v954
        %vm960 = vcmp.gt.f32.partialorder %v956, 0.0
        %vm961 = vcmp.gt.f32.partialorder %v957, 0.0
        %vm962 = vcmp.gt.f32.partialorder %v958, 0.0
        %vm963 = vcmp.gt.f32.partialorder %v959, 0.0
        %965 = vset.pattern.permute.xlu0 0
        %966 = vperm.xlu0 %965, %v930
        %v967 = vpop.permute.xlu0 %966
        %970 = vset.pattern.permute.xlu0 0
        %971 = vperm.xlu0 %970, %v931
        %v972 = vpop.permute.xlu0 %971
        %v974 = vmul.f32 %v967, %v956
        %v975 = vmul.f32 %v967, %v957
        %v976 = vmul.f32 %v972, %v958
        %v977 = vmul.f32 %v972, %v959
        %v978 = vsel %vm960, %v956, %v974
        %v979 = vsel %vm961, %v957, %v975
        %v980 = vsel %vm962, %v958, %v976
        %v981 = vsel %vm963, %v959, %v977
        %982 = vrot.lane.b32.xlu0 %v978, 17
        %v983 = vpop.permute.xlu0 %982
        %984 = vrot.lane.b32.xlu0 %v980, 17
        %v985 = vpop.permute.xlu0 %984
        %986 = vrot.lane.b32.xlu0 %v979, 17
        %v987 = vpop.permute.xlu0 %986
        %988 = vrot.lane.b32.xlu0 %v981, 17
        %v989 = vpop.permute.xlu0 %988
        %v990 = vsel %vm391, %v983, %v987
        %v991 = vsel %vm391, %v985, %v989
        %v992 = vsel %vm391, %v987, %v983
        %v993 = vsel %vm391, %v989, %v985
        %v994 = vmul.f32 %v992, %v285
        %v995 = vmul.f32 %v990, %v289
        %v996 = vmul.f32 %v993, %v285
        %v997 = vmul.f32 %v991, %v289
        %998 = vst [vmem:[#allocation2] sm:$0xff] %v994
        %999 = vst [vmem:[#allocation2 + $0x8] sm:$0xff] %v995
        %1000 = vst [vmem:[#allocation2 + $0x10] sm:$0xff] %v996
        %1001 = vst [vmem:[#allocation2 + $0x18] sm:$0xff] %v997
        %1002 = vrot.lane.b32.xlu0 %v978, 16
        %v1003 = vpop.permute.xlu0 %1002
        %1004 = vrot.lane.b32.xlu0 %v980, 16
        %v1005 = vpop.permute.xlu0 %1004
        %1006 = vrot.lane.b32.xlu0 %v979, 16
        %v1007 = vpop.permute.xlu0 %1006
        %1008 = vrot.lane.b32.xlu0 %v981, 16
        %v1009 = vpop.permute.xlu0 %1008
        %v1010 = vsel %vm402, %v1003, %v1007
        %v1011 = vsel %vm402, %v1005, %v1009
        %v1012 = vsel %vm402, %v1007, %v1003
        %v1013 = vsel %vm402, %v1009, %v1005
        %v1014 = vmul.f32 %v1012, %v298
        %v1015 = vmul.f32 %v1010, %v302
        %v1016 = vmul.f32 %v1013, %v298
        %v1017 = vmul.f32 %v1011, %v302
        %1018 = vst [vmem:[#allocation2 + $0x20] sm:$0xff] %v1014
        %1019 = vst [vmem:[#allocation2 + $0x28] sm:$0xff] %v1015
        %1020 = vst [vmem:[#allocation2 + $0x30] sm:$0xff] %v1016
        %1021 = vst [vmem:[#allocation2 + $0x38] sm:$0xff] %v1017
        %1022 = vrot.lane.b32.xlu0 %v978, 15
        %v1023 = vpop.permute.xlu0 %1022
        %1024 = vrot.lane.b32.xlu0 %v980, 15
        %v1025 = vpop.permute.xlu0 %1024
        %1026 = vrot.lane.b32.xlu0 %v979, 15
        %v1027 = vpop.permute.xlu0 %1026
        %1028 = vrot.lane.b32.xlu0 %v981, 15
        %v1029 = vpop.permute.xlu0 %1028
        %v1030 = vsel %vm413, %v1023, %v1027
        %v1031 = vsel %vm413, %v1025, %v1029
        %v1032 = vsel %vm413, %v1027, %v1023
        %v1033 = vsel %vm413, %v1029, %v1025
        %v1034 = vmul.f32 %v1032, %v311
        %v1035 = vmul.f32 %v1030, %v315
        %v1036 = vmul.f32 %v1033, %v311
        %v1037 = vmul.f32 %v1031, %v315
        %1038 = vst [vmem:[#allocation2 + $0x40] sm:$0xff] %v1034
        %1039 = vst [vmem:[#allocation2 + $0x48] sm:$0xff] %v1035
        %1040 = vst [vmem:[#allocation2 + $0x50] sm:$0xff] %v1036
        %1041 = vst [vmem:[#allocation2 + $0x58] sm:$0xff] %v1037
        %1042 = vrot.lane.b32.xlu0 %v978, 1
        %v1043 = vpop.permute.xlu0 %1042
        %1044 = vrot.lane.b32.xlu0 %v980, 1
        %v1045 = vpop.permute.xlu0 %1044
        %1046 = vrot.lane.b32.xlu0 %v979, 1
        %v1047 = vpop.permute.xlu0 %1046
        %1048 = vrot.lane.b32.xlu0 %v981, 1
        %v1049 = vpop.permute.xlu0 %1048
        %v1050 = vsel %vm424, %v1043, %v1047
        %v1051 = vsel %vm424, %v1045, %v1049
        %v1052 = vsel %vm424, %v1047, %v1043
        %v1053 = vsel %vm424, %v1049, %v1045
        %v1054 = vmul.f32 %v1052, %v324
        %v1055 = vmul.f32 %v1050, %v328
        %v1056 = vmul.f32 %v1053, %v324
        %v1057 = vmul.f32 %v1051, %v328
        %1058 = vst [vmem:[#allocation2 + $0x60] sm:$0xff] %v1054
        %1059 = vst [vmem:[#allocation2 + $0x68] sm:$0xff] %v1055
        %1060 = vst [vmem:[#allocation2 + $0x70] sm:$0xff] %v1056
        %1061 = vst [vmem:[#allocation2 + $0x78] sm:$0xff] %v1057
        %1062 = vst [vmem:[#allocation2 + $0x80] sm:$0xff] %v978
        %1063 = vst [vmem:[#allocation2 + $0x88] sm:$0xff] %v979
        %1064 = vst [vmem:[#allocation2 + $0x90] sm:$0xff] %v980
        %1065 = vst [vmem:[#allocation2 + $0x98] sm:$0xff] %v981
        %1066 = vrot.lane.b32.xlu0 %v978, 127
        %v1067 = vpop.permute.xlu0 %1066
        %1068 = vrot.lane.b32.xlu0 %v980, 127
        %v1069 = vpop.permute.xlu0 %1068
        %1070 = vrot.lane.b32.xlu0 %v979, 127
        %v1071 = vpop.permute.xlu0 %1070
        %1072 = vrot.lane.b32.xlu0 %v981, 127
        %v1073 = vpop.permute.xlu0 %1072
        %v1074 = vsel %vm437, %v1067, %v1071
        %v1075 = vsel %vm437, %v1069, %v1073
        %v1076 = vsel %vm437, %v1071, %v1067
        %v1077 = vsel %vm437, %v1073, %v1069
        %v1078 = vmul.f32 %v1074, %v337
        %v1079 = vmul.f32 %v1076, %v341
        %v1080 = vmul.f32 %v1075, %v337
        %v1081 = vmul.f32 %v1077, %v341
        %1082 = vst [vmem:[#allocation2 + $0xa0] sm:$0xff] %v1078
        %1083 = vst [vmem:[#allocation2 + $0xa8] sm:$0xff] %v1079
        %1084 = vst [vmem:[#allocation2 + $0xb0] sm:$0xff] %v1080
        %1085 = vst [vmem:[#allocation2 + $0xb8] sm:$0xff] %v1081
        %1086 = vrot.lane.b32.xlu0 %v978, 113
        %v1087 = vpop.permute.xlu0 %1086
        %1088 = vrot.lane.b32.xlu0 %v980, 113
        %v1089 = vpop.permute.xlu0 %1088
        %1090 = vrot.lane.b32.xlu0 %v979, 113
        %v1091 = vpop.permute.xlu0 %1090
        %1092 = vrot.lane.b32.xlu0 %v981, 113
        %v1093 = vpop.permute.xlu0 %1092
        %v1094 = vsel %vm448, %v1087, %v1091
        %v1095 = vsel %vm448, %v1089, %v1093
        %v1096 = vsel %vm448, %v1091, %v1087
        %v1097 = vsel %vm448, %v1093, %v1089
        %v1098 = vmul.f32 %v1094, %v350
        %v1099 = vmul.f32 %v1096, %v354
        %v1100 = vmul.f32 %v1095, %v350
        %v1101 = vmul.f32 %v1097, %v354
        %1102 = vst [vmem:[#allocation2 + $0xc0] sm:$0xff] %v1098
        %1103 = vst [vmem:[#allocation2 + $0xc8] sm:$0xff] %v1099
        %1104 = vst [vmem:[#allocation2 + $0xd0] sm:$0xff] %v1100
        %1105 = vst [vmem:[#allocation2 + $0xd8] sm:$0xff] %v1101
        %1106 = vrot.lane.b32.xlu0 %v978, 112
        %v1107 = vpop.permute.xlu0 %1106
        %1108 = vrot.lane.b32.xlu0 %v980, 112
        %v1109 = vpop.permute.xlu0 %1108
        %1110 = vrot.lane.b32.xlu0 %v979, 112
        %v1111 = vpop.permute.xlu0 %1110
        %1112 = vrot.lane.b32.xlu0 %v981, 112
        %v1113 = vpop.permute.xlu0 %1112
        %v1114 = vsel %vm459, %v1107, %v1111
        %v1115 = vsel %vm459, %v1109, %v1113
        %v1116 = vsel %vm459, %v1111, %v1107
        %v1117 = vsel %vm459, %v1113, %v1109
        %v1118 = vmul.f32 %v1114, %v363
        %v1119 = vmul.f32 %v1116, %v367
        %v1120 = vmul.f32 %v1115, %v363
        %v1121 = vmul.f32 %v1117, %v367
        %1122 = vst [vmem:[#allocation2 + $0xe0] sm:$0xff] %v1118
        %1123 = vst [vmem:[#allocation2 + $0xe8] sm:$0xff] %v1119
        %1124 = vst [vmem:[#allocation2 + $0xf0] sm:$0xff] %v1120
        %1125 = vst [vmem:[#allocation2 + $0xf8] sm:$0xff] %v1121
        %1126 = vrot.lane.b32.xlu0 %v978, 111
        %v1127 = vpop.permute.xlu0 %1126
        %1128 = vrot.lane.b32.xlu0 %v980, 111
        %v1129 = vpop.permute.xlu0 %1128
        %1130 = vrot.lane.b32.xlu0 %v979, 111
        %v1131 = vpop.permute.xlu0 %1130
        %1132 = vrot.lane.b32.xlu0 %v981, 111
        %v1133 = vpop.permute.xlu0 %1132
        %v1134 = vsel %vm470, %v1127, %v1131
        %v1135 = vsel %vm470, %v1129, %v1133
        %v1136 = vsel %vm470, %v1131, %v1127
        %v1137 = vsel %vm470, %v1133, %v1129
        %v1138 = vmul.f32 %v1134, %v376
        %v1139 = vmul.f32 %v1136, %v380
        %v1140 = vmul.f32 %v1135, %v376
        %v1141 = vmul.f32 %v1137, %v380
        %1142 = vst [vmem:[#allocation2 + $0x100] sm:$0xff] %v1138
        %1143 = vst [vmem:[#allocation2 + $0x108] sm:$0xff] %v1139
        %1144 = vst [vmem:[#allocation2 + $0x110] sm:$0xff] %v1140
        %1145 = vst [vmem:[#allocation2 + $0x118] sm:$0xff] %v1141
        %s1146 = scalar_lea.vmem %s3, 32
        %v1147 = vld [vmem:[%s1146] sm:$0xff]
        %v1148 = vld [vmem:[%s1146 + $0x8] sm:$0xff]
        %v1149 = vld [vmem:[%s1146 + $0x10] sm:$0xff]
        %v1150 = vld [vmem:[%s1146 + $0x18] sm:$0xff]
        %v1151 = vld [vmem:[#allocation2] sm:$0xff]
        %v1152 = vld [vmem:[#allocation2 + $0x8] sm:$0xff]
        %v1153 = vld [vmem:[#allocation2 + $0x10] sm:$0xff]
        %v1154 = vld [vmem:[#allocation2 + $0x18] sm:$0xff]
        %v1155 = vld [vmem:[#allocation2 + $0x20] sm:$0xff]
        %v1156 = vld [vmem:[#allocation2 + $0x28] sm:$0xff]
        %v1157 = vld [vmem:[#allocation2 + $0x30] sm:$0xff]
        %v1158 = vld [vmem:[#allocation2 + $0x38] sm:$0xff]
        %v1159 = vld [vmem:[#allocation2 + $0x40] sm:$0xff]
        %v1160 = vld [vmem:[#allocation2 + $0x48] sm:$0xff]
        %v1161 = vld [vmem:[#allocation2 + $0x50] sm:$0xff]
        %v1162 = vld [vmem:[#allocation2 + $0x58] sm:$0xff]
        %v1163 = vld [vmem:[#allocation2 + $0x60] sm:$0xff]
        %v1164 = vld [vmem:[#allocation2 + $0x68] sm:$0xff]
        %v1165 = vld [vmem:[#allocation2 + $0x70] sm:$0xff]
        %v1166 = vld [vmem:[#allocation2 + $0x78] sm:$0xff]
        %v1167 = vld [vmem:[#allocation2 + $0x80] sm:$0xff]
        %v1168 = vld [vmem:[#allocation2 + $0x88] sm:$0xff]
        %v1169 = vld [vmem:[#allocation2 + $0x90] sm:$0xff]
        %v1170 = vld [vmem:[#allocation2 + $0x98] sm:$0xff]
        %v1171 = vld [vmem:[#allocation2 + $0xa0] sm:$0xff]
        %v1172 = vld [vmem:[#allocation2 + $0xa8] sm:$0xff]
        %v1173 = vld [vmem:[#allocation2 + $0xb0] sm:$0xff]
        %v1174 = vld [vmem:[#allocation2 + $0xb8] sm:$0xff]
        %v1175 = vld [vmem:[#allocation2 + $0xc0] sm:$0xff]
        %v1176 = vld [vmem:[#allocation2 + $0xc8] sm:$0xff]
        %v1177 = vld [vmem:[#allocation2 + $0xd0] sm:$0xff]
        %v1178 = vld [vmem:[#allocation2 + $0xd8] sm:$0xff]
        %v1179 = vld [vmem:[#allocation2 + $0xe0] sm:$0xff]
        %v1180 = vld [vmem:[#allocation2 + $0xe8] sm:$0xff]
        %v1181 = vld [vmem:[#allocation2 + $0xf0] sm:$0xff]
        %v1182 = vld [vmem:[#allocation2 + $0xf8] sm:$0xff]
        %v1183 = vld [vmem:[#allocation2 + $0x100] sm:$0xff]
        %v1184 = vld [vmem:[#allocation2 + $0x108] sm:$0xff]
        %v1185 = vld [vmem:[#allocation2 + $0x110] sm:$0xff]
        %v1186 = vld [vmem:[#allocation2 + $0x118] sm:$0xff]
        %v1188 = vsel %vm841, %v1148, 0
        %v1191 = vsel %vm841, %v1150, 0
        %1193 = vmatprep.subr.mxu0 %v1152
        %1194 = vmatpush1.msra.mxu0 %v1151
        %1195 = vmatprep.subr.mxu0 %v1154
        %1196 = vmatpush1.msra.mxu0 %v1153
        %1197 = vmatprep.subr.mxu0 %v1156
        %1198 = vmatpush1.msra.mxu0 %v1155
        %1199 = vmatprep.subr.mxu0 %v1158
        %1200 = vmatpush1.msra.mxu0 %v1157
        %1201 = vmatprep.subr.mxu0 %v1160
        %1202 = vmatpush1.msra.mxu0 %v1159
        %1203 = vmatprep.subr.mxu0 %v1162
        %1204 = vmatpush1.msra.mxu0 %v1161
        %1205 = vmatprep.subr.mxu0 %v1164
        %1206 = vmatpush1.msra.mxu0 %v1163
        %1207 = vmatprep.subr.mxu0 %v1166
        %1208 = vmatpush1.msra.mxu0 %v1165
        %1209 = vmatprep.subr.mxu0 %v1168
        %1210 = vmatpush1.msra.mxu0 %v1167
        %1211 = vmatprep.subr.mxu0 %v1170
        %1212 = vmatpush1.msra.mxu0 %v1169
        %1213 = vmatprep.subr.mxu0 %v1172
        %1214 = vmatpush1.msra.mxu0 %v1171
        %1215 = vmatprep.subr.mxu0 %v1174
        %1216 = vmatpush1.msra.mxu0 %v1173
        %1217 = vmatprep.subr.mxu0 %v1176
        %1218 = vmatpush1.msra.mxu0 %v1175
        %1219 = vmatprep.subr.mxu0 %v1178
        %1220 = vmatpush1.msra.mxu0 %v1177
        %1221 = vmatprep.subr.mxu0 %v1180
        %1222 = vmatpush1.msra.mxu0 %v1179
        %1223 = vmatprep.subr.mxu0 %v1182
        %1224 = vmatpush1.msra.mxu0 %v1181
        %1225 = vmatprep.subr.mxu0 %v1184
        %1226 = vmatpush1.msra.mxu0 %v1183
        %1227 = vmatprep.subr.mxu0 %v1186
        %1228 = vmatpush1.msra.mxu0 %v1185
        %1229 = vmatprep.subr.mxu0 0.0
        %1230 = vmatpush1.msra.mxu0 0.0
        %1231 = vmatprep.subr.mxu0 0.0
        %1232 = vmatpush1.msra.mxu0 0.0
        %1233 = vmatprep.subr.mxu0 0.0
        %1234 = vmatpush1.msra.mxu0 0.0
        %1235 = vmatprep.subr.mxu0 0.0
        %1236 = vmatpush1.msra.mxu0 0.0
        %1237 = vmatprep.subr.mxu0 0.0
        %1238 = vmatpush1.msra.mxu0 0.0
        %1239 = vmatprep.subr.mxu0 0.0
        %1240 = vmatpush1.msra.mxu0 0.0
        %1241 = vmatprep.subr.mxu0 0.0
        %1242 = vmatpush1.msra.mxu0 0.0
        %1243 = vmatprep.subr.mxu0 0.0
        %1244 = vmatpush1.msra.mxu0 0.0
        %1245 = vmatprep.subr.mxu0 0.0
        %1246 = vmatpush1.msra.mxu0 0.0
        %1247 = vmatprep.subr.mxu0 0.0
        %1248 = vmatpush1.msra.mxu0 0.0
        %1249 = vmatprep.subr.mxu0 0.0
        %1250 = vmatpush1.msra.mxu0 0.0
        %1251 = vmatprep.subr.mxu0 0.0
        %1252 = vmatpush1.msra.mxu0 0.0
        %1253 = vmatprep.subr.mxu0 0.0
        %1254 = vmatpush1.msra.mxu0 0.0
        %1255 = vmatprep.subr.mxu0 0.0
        %1256 = vmatpush1.msra.mxu0 0.0
        %1257 = vmatprep.mubr.f32.mxu0 %v1188
        %1258 = vmatmul.mubr.f32.gmra.mrb[0].mxu0 %v1147
        %v1259 = vpop.f32.mrb[0].mxu0
        %v1260 = vadd.f32 0.0, %v1259
        %v1261 = vpop.f32.mrb[0].mxu0
        %v1262 = vadd.f32 0.0, %v1261
        %1263 = vmatprep.mubr.f32.mxu0 %v1191
        %1264 = vmatmul.mubr.f32.gmra.mrb[0].mxu0 %v1149
        %v1265 = vpop.f32.mrb[0].mxu0
        %v1266 = vadd.f32 0.0, %v1265
        %v1267 = vpop.f32.mrb[0].mxu0
        %v1268 = vadd.f32 0.0, %v1267
        %1269 = vdwg.mxu0
        %s1270 = scalar_lea.vmem %s4, 96
        %v1271 = vld [vmem:[%s1270] sm:$0xff]
        %v1272 = vld [vmem:[%s1270 + $0x8] sm:$0xff]
        %v1273 = vld [vmem:[%s1270 + $0x10] sm:$0xff]
        %v1274 = vld [vmem:[%s1270 + $0x18] sm:$0xff]
        %v1275 = vld [vmem:[%s1270 + $0x20] sm:$0xff]
        %v1276 = vld [vmem:[%s1270 + $0x28] sm:$0xff]
        %1278 = vset.pattern.permute.xlu0 0
        %1279 = vperm.xlu0 %1278, %v1271
        %v1280 = vpop.permute.xlu0 %1279
        %1283 = vset.pattern.permute.xlu0 0
        %1284 = vperm.xlu0 %1283, %v1272
        %v1285 = vpop.permute.xlu0 %1284
        %v1287 = vmul.f32 %v1260, %v1280
        %v1288 = vmul.f32 %v1262, %v1280
        %v1289 = vmul.f32 %v1266, %v1285
        %v1290 = vmul.f32 %v1268, %v1285
        %1292 = vset.pattern.permute.xlu0 0
        %1293 = vperm.xlu0 %1292, %v1273
        %v1294 = vpop.permute.xlu0 %1293
        %1297 = vset.pattern.permute.xlu0 0
        %1298 = vperm.xlu0 %1297, %v1274
        %v1299 = vpop.permute.xlu0 %1298
        %v1301 = vadd.f32 %v1287, %v1294
        %v1302 = vadd.f32 %v1288, %v1294
        %v1303 = vadd.f32 %v1289, %v1299
        %v1304 = vadd.f32 %v1290, %v1299
        %vm1305 = vcmp.gt.f32.partialorder %v1301, 0.0
        %vm1306 = vcmp.gt.f32.partialorder %v1302, 0.0
        %vm1307 = vcmp.gt.f32.partialorder %v1303, 0.0
        %vm1308 = vcmp.gt.f32.partialorder %v1304, 0.0
        %1310 = vset.pattern.permute.xlu0 0
        %1311 = vperm.xlu0 %1310, %v1275
        %v1312 = vpop.permute.xlu0 %1311
        %1315 = vset.pattern.permute.xlu0 0
        %1316 = vperm.xlu0 %1315, %v1276
        %v1317 = vpop.permute.xlu0 %1316
        %v1319 = vmul.f32 %v1312, %v1301
        %v1320 = vmul.f32 %v1312, %v1302
        %v1321 = vmul.f32 %v1317, %v1303
        %v1322 = vmul.f32 %v1317, %v1304
        %v1323 = vsel %vm1305, %v1301, %v1319
        %v1324 = vsel %vm1306, %v1302, %v1320
        %v1325 = vsel %vm1307, %v1303, %v1321
        %v1326 = vsel %vm1308, %v1304, %v1322
        %v1327 = vadd.f32 %v1325, %v1326
        %1328 = vadd.xlane.f32.xlu0 %v1327
        %v1329 = vpop.xlane.xlu0 %1328
        %v1330 = vmul.f32 %v1329, 0.00390625
        %v1331 = vld [vmem:[%s5] sm:$0x3]
        %v1332 = vld [vmem:[%s6] sm:$0xff]
        %v1333 = vlaneseq
        %v1334 = vshrl.u32 %v1333, 7
        %v1335 = vsub.s32 0, %v1334
        %v1336 = vrot.slane %v1330, %v1335
        %v1337 = vmul.f32 %v1331, %v1336
        %1339 = vrot.lane.b32.xlu0 %v1337, 8
        %v1340 = vpop.permute.xlu0 %1339
        %v1342 = vadd.f32 %v1331, %v1340
        %v1343 = vlaneseq
        %v1344 = vshrl.u32 %v1343, 7
        %v1345 = vsub.s32 1, %v1344
        %v1346 = vrot.slane %v1330, %v1345
        %v1347 = vmul.f32 %v1331, %v1346
        %1349 = vrot.lane.b32.xlu0 %v1347, 7
        %v1350 = vpop.permute.xlu0 %1349
        %v1352 = vadd.f32 %v1342, %v1350
        %v1353 = vlaneseq
        %v1354 = vshrl.u32 %v1353, 7
        %v1355 = vsub.s32 2, %v1354
        %v1356 = vrot.slane %v1330, %v1355
        %v1357 = vmul.f32 %v1331, %v1356
        %1359 = vrot.lane.b32.xlu0 %v1357, 6
        %v1360 = vpop.permute.xlu0 %1359
        %v1362 = vadd.f32 %v1352, %v1360
        %v1363 = vlaneseq
        %v1364 = vshrl.u32 %v1363, 7
        %v1365 = vsub.s32 3, %v1364
        %v1366 = vrot.slane %v1330, %v1365
        %v1367 = vmul.f32 %v1331, %v1366
        %1369 = vrot.lane.b32.xlu0 %v1367, 5
        %v1370 = vpop.permute.xlu0 %1369
        %v1372 = vadd.f32 %v1362, %v1370
        %v1373 = vlaneseq
        %v1374 = vshrl.u32 %v1373, 7
        %v1375 = vsub.s32 4, %v1374
        %v1376 = vrot.slane %v1330, %v1375
        %v1377 = vmul.f32 %v1331, %v1376
        %1379 = vrot.lane.b32.xlu0 %v1377, 4
        %v1380 = vpop.permute.xlu0 %1379
        %v1382 = vadd.f32 %v1372, %v1380
        %v1383 = vlaneseq
        %v1384 = vshrl.u32 %v1383, 7
        %v1385 = vsub.s32 5, %v1384
        %v1386 = vrot.slane %v1330, %v1385
        %v1387 = vmul.f32 %v1331, %v1386
        %1389 = vrot.lane.b32.xlu0 %v1387, 3
        %v1390 = vpop.permute.xlu0 %1389
        %v1392 = vadd.f32 %v1382, %v1390
        %v1393 = vlaneseq
        %v1394 = vshrl.u32 %v1393, 7
        %v1395 = vsub.s32 6, %v1394
        %v1396 = vrot.slane %v1330, %v1395
        %v1397 = vmul.f32 %v1331, %v1396
        %1399 = vrot.lane.b32.xlu0 %v1397, 2
        %v1400 = vpop.permute.xlu0 %1399
        %v1402 = vadd.f32 %v1392, %v1400
        %v1403 = vlaneseq
        %v1404 = vshrl.u32 %v1403, 7
        %v1405 = vsub.s32 7, %v1404
        %v1406 = vrot.slane %v1330, %v1405
        %v1407 = vmul.f32 %v1331, %v1406
        %1409 = vrot.lane.b32.xlu0 %v1407, 1
        %v1410 = vpop.permute.xlu0 %1409
        %v1412 = vadd.f32 %v1402, %v1410
        %vm1413 = vcmp.gt.f32.partialorder %v1412, 0.0
        %v1414 = vlaneseq
        %v1415 = vshrl.u32 %v1414, 7
        %v1416 = vsub.s32 0, %v1415
        %v1417 = vrot.slane %v1332, %v1416
        %1419 = vrot.lane.b32.xlu0 %v1412, 123
        %v1420 = vpop.permute.xlu0 %1419
        %v1422 = vmul.f32 %v1417, %v1420
        %1424 = vrot.lane.b32.xlu0 %v1422, 5
        %v1425 = vpop.permute.xlu0 %1424
        %v1427 = vsel %vm1413, %v1412, %v1425
        %v1428 = vlaneseq
        %v1429 = vshrl.u32 %v1428, 7
        %v1430 = vsub.s32 0, %v1429
        %v1431 = vrot.slane %v1427, %v1430
        %1433 = vrot.lane.b32.xlu0 %v1431, 120
        %v1434 = vpop.permute.xlu0 %1433
        %v1436 = vmul.f32 %v1332, %v1434
        %1438 = vrot.lane.b32.xlu0 %v1436, 2
        %v1439 = vpop.permute.xlu0 %1438
        %v1441 = vadd.f32 %v1332, %v1439
        %v1442 = vlaneseq
        %v1443 = vshrl.u32 %v1442, 7
        %v1444 = vsub.s32 1, %v1443
        %v1445 = vrot.slane %v1427, %v1444
        %1447 = vrot.lane.b32.xlu0 %v1445, 121
        %v1448 = vpop.permute.xlu0 %1447
        %v1450 = vmul.f32 %v1332, %v1448
        %1452 = vrot.lane.b32.xlu0 %v1450, 1
        %v1453 = vpop.permute.xlu0 %1452
        %v1455 = vadd.f32 %v1441, %v1453
        %v1456 = vxor.u32 %v1455, 2147483648
        %v1457 = vmul.f32 %v1456, 1.442695
        %v1458 = vpow.pop %v1457
        %v1459 = vadd.f32 %v1458, 1.0
        %v1460 = vrcp.pop %v1459
        %v1461 = vmul.f32 1.0, %v1460
        %1463 = vset.pattern.permute.xlu0 2
        %1464 = vperm.xlu0 %1463, %v1461
        %v1465 = vpop.permute.xlu0 %1464
        %v1467 = vmul.f32 %v1465, %v1325
        %v1468 = vmul.f32 %v1465, %v1326
        %v1469 = vadd.f32 %v1467, %v1323
        %v1470 = vadd.f32 %v1468, %v1324
        %1471 = vst [vmem:[%s272] sm:$0xff] %v1469
        %1472 = vst [vmem:[%s272 + $0x8] sm:$0xff] %v1470
        %s1473 = sand.u32 %s181, 1
        %s1474 = scalar_lea.sflag [#allocation4], %s1473
        %s1475 = sand.u32 %s181, 1
        %s1476 = smul.addr %s1475, 16
        %s1477 = scalar_lea.vmem [#allocation3], %s1476
        // Predicated region
        $region49: #{tpu_custom_call.1} parent=47 // pred_check
          %p1478 = pneg %p191
        $region50: #{tpu_custom_call.1} parent=47 // pred_check_branch
          %1480 = sbr.rel (%p1478) target = $region52
        $region51: #{tpu_custom_call.1} parent=47 // pred_region
          %s1481 = smul.u32 2, %s21
          %s1483 = ssub.s32 256, 256
          %1484 = vsyncadd %s1474, %s1483
          %s1485 = smul.addr %s1481, 128
          %s1486 = scalar_lea.hbm %s7, %s1485
          %s1488 = sshll.u32 %s1477, 4
          %s1489 = int_to_ptr.vmem [resolvable:$true] %s1488
          %1491 = dma.vmem_to_hbm [thread:$0]  %s1489, 256, %s1486, %s1474
        $region52: #{tpu_custom_call.1} parent=47 // pred_fallthru
          _
      $region48: #{tpu_custom_call.1} parent=5 // pred_fallthru
        _
      %p1492 = scmp.le.s32.totalorder 2, %s16
      // Predicated region
      $region53: #{tpu_custom_call.1} parent=5 // pred_check
        %p1493 = pneg %p1492
      $region54: #{tpu_custom_call.1} parent=5 // pred_check_branch
        %1495 = sbr.rel (%p1493) target = $region56
      $region55: #{tpu_custom_call.1} parent=5 // pred_region
        %s1496 = ssub.s32 %s16, 2
        // Predicated region
        $region57: #{tpu_custom_call.1} parent=55 // pred_check
          %p1497 = pneg %p197
        $region58: #{tpu_custom_call.1} parent=55 // pred_check_branch
          %1499 = sbr.rel (%p1497) target = $region60
        $region59: #{tpu_custom_call.1} parent=55 // pred_region
          %s1500 = sand.u32 %s182, 1
          %s1501 = scalar_lea.sflag [#allocation4], %s1500
          %s1502 = sand.u32 %s182, 1
          %s1503 = smul.addr %s1502, 16
          %s1504 = scalar_lea.vmem [#allocation3], %s1503
          %1505 = dma.done %s1501, 256
        $region60: #{tpu_custom_call.1} parent=55 // pred_fallthru
          _
      $region56: #{tpu_custom_call.1} parent=5 // pred_fallthru
        _
    $region6: #{tpu_custom_call.1} parent=1 // loop_footer
      %s20 = sadd.s32 1, %s16
    $region7: #{tpu_custom_call.1} parent=1 // loop_footer_branch
      %15 = sbr.rel target = $region3
    $region8: #{tpu_custom_call.1} parent=1 // loop_exit
      _
    %1506 = vsyncpa [#allocation4], 1
    %s1507 = scalar_lea.sflag [#allocation4], 1
    %1508 = vsyncpa %s1507, 1

</llo_original>
